<compile_context>
chip_gen: v6e
topology: v6e:2x2x1
jax: 0.10.0
libtpu: 0.0.40
codegen_flags: <defaults>
</compile_context>

<pallas_src>
import functools
import re

import numpy as np
import jax
import jax.numpy as jnp
from jax.experimental import pallas as pl
from jax.experimental.pallas import tpu as pltpu


MXU_DTYPE = jnp.bfloat16  # native MXU input dtype on v5e / v6e / v7x


def _round_up(x, m):
    return ((x + m - 1) // m) * m


def _pool_dtype_for_device():
    # bf16 VPU is native on v6e / v7x; keep the max-pool epilogue in f32 on
    # older parts (v5e and earlier have no bf16 VALU).
    try:
        kind = jax.devices()[0].device_kind.lower()
    except Exception:
        kind = ""
    if "v6" in kind or "v7" in kind:
        return jnp.bfloat16
    return jnp.float32


# ----------------------------------------------------------------------------
# Pallas kernel: fused  relu(x @ W1 + b1)  -> max over words ->  (@ W2 + b2).
# ----------------------------------------------------------------------------
def _sentence_embedding_kernel(emb_ref, w1_ref, b1_ref, w2_ref, b2_ref, o_ref,
                               *, pool_dtype):
    T, tb, Dw = emb_ref.shape          # (words, batch-tile, padded embed dim)
    Hp = w1_ref.shape[1]

    # fc1 for all T*tb token rows in a single MXU matmul (bf16 in, f32 acc).
    # tb is a multiple of 16 (bf16 sublane packing), so collapsing (T, tb) is
    # layout-free.
    x = emb_ref[...].reshape(T * tb, Dw)
    h = jnp.dot(x, w1_ref[...], preferred_element_type=jnp.float32)
    h = jnp.maximum(h + b1_ref[...], 0.0)                 # bias + ReLU, f32

    # Max-pool over the word axis as a leading-axis reduction (independent
    # work for the 4 VALU slots instead of a T-1 long serial chain).  bf16 on
    # v6e/v7x halves h's vreg/VMEM footprint; max is monotone, so the bf16
    # max equals the bf16 rounding of the f32 max (m was cast to bf16 for the
    # fc2 MXU input anyway).
    h = h.astype(pool_dtype).reshape(T, tb, Hp)
    m = jnp.max(h, axis=0)                                # (tb, Hp)

    # fc2 on the pooled features (bf16 in, f32 acc) + bias.
    y = jnp.dot(m.astype(w2_ref.dtype), w2_ref[...],
                preferred_element_type=jnp.float32) + b2_ref[...]
    o_ref[...] = y.astype(o_ref.dtype)


# ----------------------------------------------------------------------------
# One-time parameter preprocessing (hoisted out of the forward path).
# ----------------------------------------------------------------------------
def prepare_sentence_embedding_params(params):
    """Pad / transpose / cast weights and the embedding table ONCE.

    Returns a dict of arrays only (safe to pass through jax.jit):
      table_p : (V, Dwp)  bf16   pre-padded, pre-cast embedding table
      w1_p    : (Dwp, Hp) bf16   fc1 weight, (in, out), padded
      b1_p    : (1, Hp)   f32
      w2_p    : (Hp, Ep)  bf16   fc2 weight, (in, out), padded
      b2_p    : (1, Ep)   f32
    """
    table = params["word_embd"]                  # (V, Dw)  f32
    w1, b1 = params["fc1_w"], params["fc1_b"]    # (H, Dw), (H,)
    w2, b2 = params["fc2_w"], params["fc2_b"]    # (E, H),  (E,)

    Dw = table.shape[1]
    H = w1.shape[0]
    E = w2.shape[0]
    Dwp, Hp, Ep = (_round_up(d, 128) for d in (Dw, H, E))

    return dict(
        table_p=jnp.pad(table, ((0, 0), (0, Dwp - Dw))).astype(MXU_DTYPE),
        w1_p=jnp.pad(w1, ((0, Hp - H), (0, Dwp - Dw))).T.astype(MXU_DTYPE),
        b1_p=jnp.pad(b1, (0, Hp - H)).reshape(1, Hp).astype(jnp.float32),
        w2_p=jnp.pad(w2, ((0, Ep - E), (0, Hp - H))).T.astype(MXU_DTYPE),
        b2_p=jnp.pad(b2, (0, Ep - E)).reshape(1, Ep).astype(jnp.float32),
    )


# ----------------------------------------------------------------------------
# Forward wrapper: gather embeddings (plain JAX, no extra copies), run kernel.
# ----------------------------------------------------------------------------
def sentence_embedding_forward(prep, ids, *, out_dim, block_b=256):
    """prep: output of prepare_sentence_embedding_params.
    ids: (B, T) int32 token ids.  Returns (B, out_dim) float32."""
    table_p = prep["table_p"]                    # (V, Dwp) bf16
    w1p, b1p = prep["w1_p"], prep["b1_p"]
    w2p, b2p = prep["w2_p"], prep["b2_p"]

    B, T = ids.shape
    Dwp = table_p.shape[1]
    Hp = w1p.shape[1]
    Ep = w2p.shape[1]

    # Batch tile: multiple of 16 (bf16 sublane packing), up to block_b.
    tb = min(_round_up(block_b, 16), _round_up(B, 16))
    # If the whole batch fits in one grid step and is >= 32 rows, split into
    # >= 2 steps: spreads work over both v7x TensorCores and lets the pipeline
    # prefetch tile i+1 under compute of tile i.
    if _round_up(B, tb) == tb and tb >= 32:
        tb = _round_up((tb + 1) // 2, 16)
    Bp = _round_up(B, tb)

    # Pad the (tiny) id array, not the gathered activation: token id 0 maps to
    # a real embedding row exactly as the PyTorch module's pad token does, and
    # the padded batch rows are sliced off at the end.  The gather from the
    # pre-padded bf16 table directly yields the final (T, Bp, Dwp) layout.
    ids_p = jnp.pad(ids.astype(jnp.int32), ((0, Bp - B), (0, 0)))
    emb = jnp.take(table_p, ids_p.T, axis=0)               # (T, Bp, Dwp) bf16

    pool_dtype = _pool_dtype_for_device()
    kernel = functools.partial(_sentence_embedding_kernel,
                               pool_dtype=pool_dtype)

    cost = pl.CostEstimate(
        flops=2 * Bp * T * Dwp * Hp + 2 * Bp * Hp * Ep,
        transcendentals=0,
        bytes_accessed=(emb.size * 2 + w1p.size * 2 + w2p.size * 2
                        + b1p.size * 4 + b2p.size * 4 + Bp * Ep * 4),
    )

    out = pl.pallas_call(
        kernel,
        out_shape=jax.ShapeDtypeStruct((Bp, Ep), jnp.float32),
        grid_spec=pltpu.PrefetchScalarGridSpec(
            num_scalar_prefetch=0,
            grid=(Bp // tb,),
            in_specs=[
                pl.BlockSpec((T, tb, Dwp), lambda i: (0, i, 0)),   # emb tile
                pl.BlockSpec((Dwp, Hp), lambda i: (0, 0)),          # W1 (resident)
                pl.BlockSpec((1, Hp), lambda i: (0, 0)),            # b1
                pl.BlockSpec((Hp, Ep), lambda i: (0, 0)),           # W2 (resident)
                pl.BlockSpec((1, Ep), lambda i: (0, 0)),            # b2
            ],
            out_specs=pl.BlockSpec((tb, Ep), lambda i: (i, 0)),     # lane-dense
        ),
        compiler_params=pltpu.CompilerParams(
            dimension_semantics=("parallel",),
        ),
        cost_estimate=cost,
    )(emb, w1p, b1p, w2p, b2p)

    return out[:B, :out_dim]


# ----------------------------------------------------------------------------
# Host-side text preprocessing (CPU, pure Python) -- mirrors words_to_ids().
# ----------------------------------------------------------------------------
class SimpleTokenizer:
    """In-script stand-in for the np.load(token_to_word_path) vocabulary."""

    def __init__(self, vocab_words, max_words=16):
        self.word_to_token = {w: i + 1 for i, w in enumerate(vocab_words)}
        self.max_words = max_words

    def _split_text(self, sentence):
        return re.findall(r"[\w']+", str(sentence))

    def words_to_ids(self, sentences):
        rows = []
        for s in sentences:
            toks = [self.word_to_token[w] for w in self._split_text(s)
                    if w in self.word_to_token]
            toks = toks[: self.max_words]
            toks = toks + [0] * (self.max_words - len(toks))
            rows.append(toks)
        return jnp.asarray(np.asarray(rows, dtype=np.int32))


# ----------------------------------------------------------------------------
# Parameter init (PyTorch defaults: Embedding N(0,1), Linear U(+-1/sqrt(fan_in))).
# ----------------------------------------------------------------------------
def init_sentence_embedding_params(key, num_embeddings, word_embedding_dim,
                                   output_dim, embd_dim):
    k = jax.random.split(key, 5)
    table = jax.random.normal(k[0], (num_embeddings, word_embedding_dim),
                              jnp.float32)
    lim1 = 1.0 / np.sqrt(word_embedding_dim)
    w1 = jax.random.uniform(k[1], (output_dim, word_embedding_dim),
                            jnp.float32, -lim1, lim1)
    b1 = jax.random.uniform(k[2], (output_dim,), jnp.float32, -lim1, lim1)
    lim2 = 1.0 / np.sqrt(output_dim)
    w2 = jax.random.uniform(k[3], (embd_dim, output_dim),
                            jnp.float32, -lim2, lim2)
    b2 = jax.random.uniform(k[4], (embd_dim,), jnp.float32, -lim2, lim2)
    return dict(word_embd=table, fc1_w=w1, fc1_b=b1, fc2_w=w2, fc2_b=b2)


# ----------------------------------------------------------------------------
# Pure-JAX f32 reference (no Pallas) for the correctness check.
# ----------------------------------------------------------------------------
def _ref_forward(params, ids):
    e = jnp.take(params["word_embd"], ids, axis=0)                 # (B, T, Dw)
    h = jnp.einsum("btd,hd->bth", e, params["fc1_w"]) + params["fc1_b"]
    h = jnp.maximum(h, 0.0)
    m = jnp.max(h, axis=1)                                         # (B, H)
    return jnp.einsum("bh,eh->be", m, params["fc2_w"]) + params["fc2_b"]


if __name__ == "__main__":
    # Small config consistent with the module:
    #   Sentence_Embedding(embd_dim=256, num_embeddings=2000,
    #                      word_embedding_dim=300, max_words=16, output_dim=512)
    embd_dim = 256
    num_embeddings = 2000
    word_embedding_dim = 300
    max_words = 16
    output_dim = 512
    batch = 4

    key = jax.random.PRNGKey(0)
    kp, kid = jax.random.split(key)
    params = init_sentence_embedding_params(
        kp, num_embeddings, word_embedding_dim, output_dim, embd_dim)

    # One-time hoisted preprocessing (pad / transpose / cast); arrays only.
    prep = prepare_sentence_embedding_params(params)

    fwd = jax.jit(functools.partial(sentence_embedding_forward,
                                    out_dim=embd_dim, block_b=256))

    # --- token-id path (forward(x, raw_text=False)) -------------------------
    ids = jax.random.randint(kid, (batch, max_words), 0, num_embeddings,
                             dtype=jnp.int32)
    out = jax.block_until_ready(fwd(prep, ids))

    ref = _ref_forward(params, ids)
    assert out.shape == ref.shape == (batch, embd_dim), out.shape
    err = float(jnp.max(jnp.abs(out - ref)))
    scale = float(jnp.max(jnp.abs(ref))) + 1e-6
    # bf16 MXU inputs with f32 accumulation -> loose tolerance vs f32 ref.
    assert err / scale < 2e-2, (err, scale)

    # --- raw-text path (forward(x, raw_text=True) equivalent) ---------------
    vocab = ["a", "person", "is", "cooking", "food", "in", "the", "kitchen",
             "dog", "running"]
    tok = SimpleTokenizer(vocab, max_words=max_words)
    raw_ids = tok.words_to_ids(["a person is cooking food in the kitchen",
                                "the dog is running"])
    out_raw = jax.block_until_ready(fwd(prep, raw_ids))
    ref_raw = _ref_forward(params, raw_ids)
    assert out_raw.shape == (2, embd_dim), out_raw.shape
    err2 = float(jnp.max(jnp.abs(out_raw - ref_raw)))
    scale2 = float(jnp.max(jnp.abs(ref_raw))) + 1e-6
    assert err2 / scale2 < 2e-2, (err2, scale2)

    print("KERNEL_OK")
</pallas_src>

<mosaic_0001>
module attributes {stable_mosaic.version = 11 : i64} {
  func.func @_sentence_embedding_kernel(%arg0: i32, %arg1: memref<16x16x384xbf16, #tpu.memory_space<vmem>>, %arg2: memref<384x512xbf16, #tpu.memory_space<vmem>>, %arg3: memref<1x512xf32, #tpu.memory_space<vmem>>, %arg4: memref<512x256xbf16, #tpu.memory_space<vmem>>, %arg5: memref<1x256xf32, #tpu.memory_space<vmem>>, %arg6: memref<16x256xf32, #tpu.memory_space<vmem>>) attributes {dimension_semantics = [#tpu.dimension_semantics<parallel>], iteration_bounds = array<i64: 1>, scalar_prefetch = 0 : i64, scratch_operands = 0 : i64, tpu.core_type = #tpu.core_type<tc>, window_params = [{transform_indices = @transform_0, window_bounds = array<i64: 16, 16, 384>}, {pipeline_mode = #tpu.pipeline_mode<synchronous>, transform_indices = @transform_1, window_bounds = array<i64: 384, 512>}, {pipeline_mode = #tpu.pipeline_mode<synchronous>, transform_indices = @transform_2, window_bounds = array<i64: 1, 512>}, {pipeline_mode = #tpu.pipeline_mode<synchronous>, transform_indices = @transform_3, window_bounds = array<i64: 512, 256>}, {pipeline_mode = #tpu.pipeline_mode<synchronous>, transform_indices = @transform_4, window_bounds = array<i64: 1, 256>}, {transform_indices = @transform_5, window_bounds = array<i64: 16, 256>}]} {
    %c0 = arith.constant 0 : index
    %c0_0 = arith.constant 0 : index
    %c0_1 = arith.constant 0 : index
    %0 = vector.load %arg1[%c0, %c0_0, %c0_1] : memref<16x16x384xbf16, #tpu.memory_space<vmem>>, vector<16x16x384xbf16>
    %1 = vector.shape_cast %0 : vector<16x16x384xbf16> to vector<256x384xbf16>
    %c0_2 = arith.constant 0 : index
    %c0_3 = arith.constant 0 : index
    %2 = vector.load %arg2[%c0_2, %c0_3] : memref<384x512xbf16, #tpu.memory_space<vmem>>, vector<384x512xbf16>
    %cst = arith.constant dense<0.000000e+00> : vector<256x512xf32>
    %3 = tpu.matmul %1, %2, %cst {dimension_numbers = #tpu.dot_dimension_numbers<[1], [0], [0], [1], [0, 0, 1, 1], [], []>} : vector<256x384xbf16>, vector<384x512xbf16>, vector<256x512xf32> -> vector<256x512xf32>
    %c0_4 = arith.constant 0 : index
    %c0_5 = arith.constant 0 : index
    %4 = vector.load %arg3[%c0_4, %c0_5] : memref<1x512xf32, #tpu.memory_space<vmem>>, vector<1x512xf32>
    %5 = vector.broadcast %4 : vector<1x512xf32> to vector<256x512xf32>
    %6 = arith.addf %3, %5 : vector<256x512xf32>
    %cst_6 = arith.constant 0.000000e+00 : f32
    %7 = vector.broadcast %cst_6 : f32 to vector<256x512xf32>
    %8 = arith.maximumf %6, %7 : vector<256x512xf32>
    %9 = vector.shape_cast %8 : vector<256x512xf32> to vector<16x16x512xf32>
    %cst_7 = arith.constant dense<0xFF800000> : vector<16x512xf32>
    %10 = vector.multi_reduction <maximumf>, %9, %cst_7 [0] : vector<16x16x512xf32> to vector<16x512xf32>
    %11 = arith.truncf %10 : vector<16x512xf32> to vector<16x512xbf16>
    %c0_8 = arith.constant 0 : index
    %c0_9 = arith.constant 0 : index
    %12 = vector.load %arg4[%c0_8, %c0_9] : memref<512x256xbf16, #tpu.memory_space<vmem>>, vector<512x256xbf16>
    %cst_10 = arith.constant dense<0.000000e+00> : vector<16x256xf32>
    %13 = tpu.matmul %11, %12, %cst_10 {dimension_numbers = #tpu.dot_dimension_numbers<[1], [0], [0], [1], [0, 0, 1, 1], [], []>} : vector<16x512xbf16>, vector<512x256xbf16>, vector<16x256xf32> -> vector<16x256xf32>
    %c0_11 = arith.constant 0 : index
    %c0_12 = arith.constant 0 : index
    %14 = vector.load %arg5[%c0_11, %c0_12] : memref<1x256xf32, #tpu.memory_space<vmem>>, vector<1x256xf32>
    %15 = vector.broadcast %14 : vector<1x256xf32> to vector<16x256xf32>
    %16 = arith.addf %13, %15 : vector<16x256xf32>
    %c0_13 = arith.constant 0 : index
    %c0_14 = arith.constant 0 : index
    %17 = vector.load %arg6[%c0_13, %c0_14] : memref<16x256xf32, #tpu.memory_space<vmem>>, vector<16x256xf32>
    tpu.vector_store %arg6[%c0_13, %c0_14], %16 {strides = array<i32>} : memref<16x256xf32, #tpu.memory_space<vmem>>, vector<16x256xf32>,
    return
  }
  func.func @transform_0(%arg0: i32) -> (i32, i32, i32) {
    %c0_i32 = arith.constant 0 : i32
    %c0_i32_0 = arith.constant 0 : i32
    %c0_i32_1 = arith.constant 0 : i32
    return %c0_i32, %arg0, %c0_i32_0 : i32, i32, i32
  }
  func.func @transform_1(%arg0: i32) -> (i32, i32) {
    %c0_i32 = arith.constant 0 : i32
    %c0_i32_0 = arith.constant 0 : i32
    %c0_i32_1 = arith.constant 0 : i32
    return %c0_i32, %c0_i32_0 : i32, i32
  }
  func.func @transform_2(%arg0: i32) -> (i32, i32) {
    %c0_i32 = arith.constant 0 : i32
    %c0_i32_0 = arith.constant 0 : i32
    %c0_i32_1 = arith.constant 0 : i32
    return %c0_i32, %c0_i32_0 : i32, i32
  }
  func.func @transform_3(%arg0: i32) -> (i32, i32) {
    %c0_i32 = arith.constant 0 : i32
    %c0_i32_0 = arith.constant 0 : i32
    %c0_i32_1 = arith.constant 0 : i32
    return %c0_i32, %c0_i32_0 : i32, i32
  }
  func.func @transform_4(%arg0: i32) -> (i32, i32) {
    %c0_i32 = arith.constant 0 : i32
    %c0_i32_0 = arith.constant 0 : i32
    %c0_i32_1 = arith.constant 0 : i32
    return %c0_i32, %c0_i32_0 : i32, i32
  }
  func.func @transform_5(%arg0: i32) -> (i32, i32) {
    %c0_i32 = arith.constant 0 : i32
    %c0_i32_0 = arith.constant 0 : i32
    return %arg0, %c0_i32 : i32, i32
  }
}

</mosaic_0001>

<llo_original>
// kernel: sentence_embedding_forward.1
$region0: #{sentence_embedding_forward.1}
  #allocation0 [shape = 'u32[]', space=smem, size = 0x4, offset = 0x4, fixed_abs, tag = 'smem constant byte address 0x4 - core index']
  #allocation1 [shape = 'u32[144,128]{1,0:T(1,128)}', space=vmem, size = 0x12000, scoped, tag = 'internal scratch']
  %s0 = inlined_call_operand.vmem [shape: bf16[16,16,384], index: 0, kind: input, shape index: {}]
  %s1 = inlined_call_operand.vmem [shape: bf16[384,512], index: 1, kind: input, shape index: {}]
  %s2 = inlined_call_operand.vmem [shape: f32[1,512], index: 2, kind: input, shape index: {}]
  %s3 = inlined_call_operand.vmem [shape: bf16[512,256], index: 3, kind: input, shape index: {}]
  %s4 = inlined_call_operand.vmem [shape: f32[1,256], index: 4, kind: input, shape index: {}]
  %s5 = inlined_call_operand.vmem [shape: f32[16,256], index: 5, kind: output, shape index: {}]
  %s6 = sld [smem:[#allocation0]]
  $region30: #{sentence_embedding_forward.1} parent=0
    _
  %s8 = ssub.s32 1, %s6
  %s9 = scalar_select 0, %s8, %s6
  // Predicated region
  $region2: #{sentence_embedding_forward.1} parent=0 // pred_check
    _
  $region3: #{sentence_embedding_forward.1} parent=0 // pred_check_branch
    %11 = sbr.rel (0) target = $region5
  $region4: #{sentence_embedding_forward.1} parent=0 // pred_region
    _
  $region5: #{sentence_embedding_forward.1} parent=0 // pred_fallthru
    _
  // Predicated region
  $region6: #{sentence_embedding_forward.1} parent=0 // pred_check
    _
  $region7: #{sentence_embedding_forward.1} parent=0 // pred_check_branch
    %13 = sbr.rel (0) target = $region9
  $region8: #{sentence_embedding_forward.1} parent=0 // pred_region
    _
  $region9: #{sentence_embedding_forward.1} parent=0 // pred_fallthru
    _
  // Predicated region
  $region10: #{sentence_embedding_forward.1} parent=0 // pred_check
    _
  $region11: #{sentence_embedding_forward.1} parent=0 // pred_check_branch
    %15 = sbr.rel (0) target = $region13
  $region12: #{sentence_embedding_forward.1} parent=0 // pred_region
    _
  $region13: #{sentence_embedding_forward.1} parent=0 // pred_fallthru
    _
  // Predicated region
  $region14: #{sentence_embedding_forward.1} parent=0 // pred_check
    _
  $region15: #{sentence_embedding_forward.1} parent=0 // pred_check_branch
    %17 = sbr.rel (0) target = $region17
  $region16: #{sentence_embedding_forward.1} parent=0 // pred_region
    _
  $region17: #{sentence_embedding_forward.1} parent=0 // pred_fallthru
    _
  // Predicated region
  $region18: #{sentence_embedding_forward.1} parent=0 // pred_check
    _
  $region19: #{sentence_embedding_forward.1} parent=0 // pred_check_branch
    %19 = sbr.rel (0) target = $region21
  $region20: #{sentence_embedding_forward.1} parent=0 // pred_region
    _
  $region21: #{sentence_embedding_forward.1} parent=0 // pred_fallthru
    _
  %v21 = vld [vmem:[%s0] sm:$0xff]
  %v22 = vld [vmem:[%s0 + $0x8] sm:$0xf]
  %v23 = vld [vmem:[%s0 + $0xc] sm:$0xff]
  %v24 = vld [vmem:[%s0 + $0x14] sm:$0xf]
  %v25 = vld [vmem:[%s0 + $0x18] sm:$0xff]
  %v26 = vld [vmem:[%s0 + $0x20] sm:$0xf]
  %v27 = vld [vmem:[%s0 + $0x24] sm:$0xff]
  %v28 = vld [vmem:[%s0 + $0x2c] sm:$0xf]
  %v29 = vld [vmem:[%s0 + $0x30] sm:$0xff]
  %v30 = vld [vmem:[%s0 + $0x38] sm:$0xf]
  %v31 = vld [vmem:[%s0 + $0x3c] sm:$0xff]
  %v32 = vld [vmem:[%s0 + $0x44] sm:$0xf]
  %v33 = vld [vmem:[%s0 + $0x48] sm:$0xff]
  %v34 = vld [vmem:[%s0 + $0x50] sm:$0xf]
  %v35 = vld [vmem:[%s0 + $0x54] sm:$0xff]
  %v36 = vld [vmem:[%s0 + $0x5c] sm:$0xf]
  %v37 = vld [vmem:[%s0 + $0x60] sm:$0xff]
  %v38 = vld [vmem:[%s0 + $0x68] sm:$0xf]
  %v39 = vld [vmem:[%s0 + $0x6c] sm:$0xff]
  %v40 = vld [vmem:[%s0 + $0x74] sm:$0xf]
  %v41 = vld [vmem:[%s0 + $0x78] sm:$0xff]
  %v42 = vld [vmem:[%s0 + $0x80] sm:$0xf]
  %v43 = vld [vmem:[%s0 + $0x84] sm:$0xff]
  %v44 = vld [vmem:[%s0 + $0x8c] sm:$0xf]
  %v45 = vld [vmem:[%s0 + $0x90] sm:$0xff]
  %v46 = vld [vmem:[%s0 + $0x98] sm:$0xf]
  %v47 = vld [vmem:[%s0 + $0x9c] sm:$0xff]
  %v48 = vld [vmem:[%s0 + $0xa4] sm:$0xf]
  %v49 = vld [vmem:[%s0 + $0xa8] sm:$0xff]
  %v50 = vld [vmem:[%s0 + $0xb0] sm:$0xf]
  %v51 = vld [vmem:[%s0 + $0xb4] sm:$0xff]
  %v52 = vld [vmem:[%s0 + $0xbc] sm:$0xf]
  %v53 = vld [vmem:[%s0 + $0xc0] sm:$0xff]
  %v54 = vld [vmem:[%s0 + $0xc8] sm:$0xf]
  %v55 = vld [vmem:[%s0 + $0xcc] sm:$0xff]
  %v56 = vld [vmem:[%s0 + $0xd4] sm:$0xf]
  %v57 = vld [vmem:[%s0 + $0xd8] sm:$0xff]
  %v58 = vld [vmem:[%s0 + $0xe0] sm:$0xf]
  %v59 = vld [vmem:[%s0 + $0xe4] sm:$0xff]
  %v60 = vld [vmem:[%s0 + $0xec] sm:$0xf]
  %v61 = vld [vmem:[%s0 + $0xf0] sm:$0xff]
  %v62 = vld [vmem:[%s0 + $0xf8] sm:$0xf]
  %v63 = vld [vmem:[%s0 + $0xfc] sm:$0xff]
  %v64 = vld [vmem:[%s0 + $0x104] sm:$0xf]
  %v65 = vld [vmem:[%s0 + $0x108] sm:$0xff]
  %v66 = vld [vmem:[%s0 + $0x110] sm:$0xf]
  %v67 = vld [vmem:[%s0 + $0x114] sm:$0xff]
  %v68 = vld [vmem:[%s0 + $0x11c] sm:$0xf]
  %v69 = vld [vmem:[%s0 + $0x120] sm:$0xff]
  %v70 = vld [vmem:[%s0 + $0x128] sm:$0xf]
  %v71 = vld [vmem:[%s0 + $0x12c] sm:$0xff]
  %v72 = vld [vmem:[%s0 + $0x134] sm:$0xf]
  %v73 = vld [vmem:[%s0 + $0x138] sm:$0xff]
  %v74 = vld [vmem:[%s0 + $0x140] sm:$0xf]
  %v75 = vld [vmem:[%s0 + $0x144] sm:$0xff]
  %v76 = vld [vmem:[%s0 + $0x14c] sm:$0xf]
  %v77 = vld [vmem:[%s0 + $0x150] sm:$0xff]
  %v78 = vld [vmem:[%s0 + $0x158] sm:$0xf]
  %v79 = vld [vmem:[%s0 + $0x15c] sm:$0xff]
  %v80 = vld [vmem:[%s0 + $0x164] sm:$0xf]
  %v81 = vld [vmem:[%s0 + $0x168] sm:$0xff]
  %v82 = vld [vmem:[%s0 + $0x170] sm:$0xf]
  %v83 = vld [vmem:[%s0 + $0x174] sm:$0xff]
  %v84 = vld [vmem:[%s0 + $0x17c] sm:$0xf]
  %v85 = vld [vmem:[%s1] sm:$0xff]
  %v86 = vld [vmem:[%s1 + $0x8] sm:$0xff]
  %v87 = vld [vmem:[%s1 + $0x10] sm:$0xff]
  %v88 = vld [vmem:[%s1 + $0x18] sm:$0xff]
  %v89 = vld [vmem:[%s1 + $0x20] sm:$0xff]
  %v90 = vld [vmem:[%s1 + $0x28] sm:$0xff]
  %v91 = vld [vmem:[%s1 + $0x30] sm:$0xff]
  %v92 = vld [vmem:[%s1 + $0x38] sm:$0xff]
  %v93 = vld [vmem:[%s1 + $0x40] sm:$0xff]
  %v94 = vld [vmem:[%s1 + $0x48] sm:$0xff]
  %v95 = vld [vmem:[%s1 + $0x50] sm:$0xff]
  %v96 = vld [vmem:[%s1 + $0x58] sm:$0xff]
  %v97 = vld [vmem:[%s1 + $0x60] sm:$0xff]
  %v98 = vld [vmem:[%s1 + $0x68] sm:$0xff]
  %v99 = vld [vmem:[%s1 + $0x70] sm:$0xff]
  %v100 = vld [vmem:[%s1 + $0x78] sm:$0xff]
  %v101 = vld [vmem:[%s1 + $0x80] sm:$0xff]
  %v102 = vld [vmem:[%s1 + $0x88] sm:$0xff]
  %v103 = vld [vmem:[%s1 + $0x90] sm:$0xff]
  %v104 = vld [vmem:[%s1 + $0x98] sm:$0xff]
  %v105 = vld [vmem:[%s1 + $0xa0] sm:$0xff]
  %v106 = vld [vmem:[%s1 + $0xa8] sm:$0xff]
  %v107 = vld [vmem:[%s1 + $0xb0] sm:$0xff]
  %v108 = vld [vmem:[%s1 + $0xb8] sm:$0xff]
  %v109 = vld [vmem:[%s1 + $0xc0] sm:$0xff]
  %v110 = vld [vmem:[%s1 + $0xc8] sm:$0xff]
  %v111 = vld [vmem:[%s1 + $0xd0] sm:$0xff]
  %v112 = vld [vmem:[%s1 + $0xd8] sm:$0xff]
  %v113 = vld [vmem:[%s1 + $0xe0] sm:$0xff]
  %v114 = vld [vmem:[%s1 + $0xe8] sm:$0xff]
  %v115 = vld [vmem:[%s1 + $0xf0] sm:$0xff]
  %v116 = vld [vmem:[%s1 + $0xf8] sm:$0xff]
  %v117 = vld [vmem:[%s1 + $0x100] sm:$0xff]
  %v118 = vld [vmem:[%s1 + $0x108] sm:$0xff]
  %v119 = vld [vmem:[%s1 + $0x110] sm:$0xff]
  %v120 = vld [vmem:[%s1 + $0x118] sm:$0xff]
  %v121 = vld [vmem:[%s1 + $0x120] sm:$0xff]
  %v122 = vld [vmem:[%s1 + $0x128] sm:$0xff]
  %v123 = vld [vmem:[%s1 + $0x130] sm:$0xff]
  %v124 = vld [vmem:[%s1 + $0x138] sm:$0xff]
  %v125 = vld [vmem:[%s1 + $0x140] sm:$0xff]
  %v126 = vld [vmem:[%s1 + $0x148] sm:$0xff]
  %v127 = vld [vmem:[%s1 + $0x150] sm:$0xff]
  %v128 = vld [vmem:[%s1 + $0x158] sm:$0xff]
  %v129 = vld [vmem:[%s1 + $0x160] sm:$0xff]
  %v130 = vld [vmem:[%s1 + $0x168] sm:$0xff]
  %v131 = vld [vmem:[%s1 + $0x170] sm:$0xff]
  %v132 = vld [vmem:[%s1 + $0x178] sm:$0xff]
  %v133 = vld [vmem:[%s1 + $0x180] sm:$0xff]
  %v134 = vld [vmem:[%s1 + $0x188] sm:$0xff]
  %v135 = vld [vmem:[%s1 + $0x190] sm:$0xff]
  %v136 = vld [vmem:[%s1 + $0x198] sm:$0xff]
  %v137 = vld [vmem:[%s1 + $0x1a0] sm:$0xff]
  %v138 = vld [vmem:[%s1 + $0x1a8] sm:$0xff]
  %v139 = vld [vmem:[%s1 + $0x1b0] sm:$0xff]
  %v140 = vld [vmem:[%s1 + $0x1b8] sm:$0xff]
  %v141 = vld [vmem:[%s1 + $0x1c0] sm:$0xff]
  %v142 = vld [vmem:[%s1 + $0x1c8] sm:$0xff]
  %v143 = vld [vmem:[%s1 + $0x1d0] sm:$0xff]
  %v144 = vld [vmem:[%s1 + $0x1d8] sm:$0xff]
  %v145 = vld [vmem:[%s1 + $0x1e0] sm:$0xff]
  %v146 = vld [vmem:[%s1 + $0x1e8] sm:$0xff]
  %v147 = vld [vmem:[%s1 + $0x1f0] sm:$0xff]
  %v148 = vld [vmem:[%s1 + $0x1f8] sm:$0xff]
  %v149 = vld [vmem:[%s1 + $0x200] sm:$0xff]
  %v150 = vld [vmem:[%s1 + $0x208] sm:$0xff]
  %v151 = vld [vmem:[%s1 + $0x210] sm:$0xff]
  %v152 = vld [vmem:[%s1 + $0x218] sm:$0xff]
  %v153 = vld [vmem:[%s1 + $0x220] sm:$0xff]
  %v154 = vld [vmem:[%s1 + $0x228] sm:$0xff]
  %v155 = vld [vmem:[%s1 + $0x230] sm:$0xff]
  %v156 = vld [vmem:[%s1 + $0x238] sm:$0xff]
  %v157 = vld [vmem:[%s1 + $0x240] sm:$0xff]
  %v158 = vld [vmem:[%s1 + $0x248] sm:$0xff]
  %v159 = vld [vmem:[%s1 + $0x250] sm:$0xff]
  %v160 = vld [vmem:[%s1 + $0x258] sm:$0xff]
  %v161 = vld [vmem:[%s1 + $0x260] sm:$0xff]
  %v162 = vld [vmem:[%s1 + $0x268] sm:$0xff]
  %v163 = vld [vmem:[%s1 + $0x270] sm:$0xff]
  %v164 = vld [vmem:[%s1 + $0x278] sm:$0xff]
  %v165 = vld [vmem:[%s1 + $0x280] sm:$0xff]
  %v166 = vld [vmem:[%s1 + $0x288] sm:$0xff]
  %v167 = vld [vmem:[%s1 + $0x290] sm:$0xff]
  %v168 = vld [vmem:[%s1 + $0x298] sm:$0xff]
  %v169 = vld [vmem:[%s1 + $0x2a0] sm:$0xff]
  %v170 = vld [vmem:[%s1 + $0x2a8] sm:$0xff]
  %v171 = vld [vmem:[%s1 + $0x2b0] sm:$0xff]
  %v172 = vld [vmem:[%s1 + $0x2b8] sm:$0xff]
  %v173 = vld [vmem:[%s1 + $0x2c0] sm:$0xff]
  %v174 = vld [vmem:[%s1 + $0x2c8] sm:$0xff]
  %v175 = vld [vmem:[%s1 + $0x2d0] sm:$0xff]
  %v176 = vld [vmem:[%s1 + $0x2d8] sm:$0xff]
  %v177 = vld [vmem:[%s1 + $0x2e0] sm:$0xff]
  %v178 = vld [vmem:[%s1 + $0x2e8] sm:$0xff]
  %v179 = vld [vmem:[%s1 + $0x2f0] sm:$0xff]
  %v180 = vld [vmem:[%s1 + $0x2f8] sm:$0xff]
  %v181 = vld [vmem:[%s2] sm:$0xf]
  %v183 = vlaneseq
  %v184 = vshrl.u32 %v183, 7
  %v185 = vsub.s32 0, %v184
  %v186 = vrot.slane %v181, %v185
  %v187 = vlaneseq
  %v188 = vshrl.u32 %v187, 7
  %v189 = vsub.s32 1, %v188
  %v190 = vrot.slane %v181, %v189
  %v191 = vlaneseq
  %v192 = vshrl.u32 %v191, 7
  %v193 = vsub.s32 2, %v192
  %v194 = vrot.slane %v181, %v193
  %v195 = vlaneseq
  %v196 = vshrl.u32 %v195, 7
  %v197 = vsub.s32 3, %v196
  %v198 = vrot.slane %v181, %v197
  %v267 = vunpack.c.l.b16 %v21
  %v268 = vunpack.c.h.b16 %v21
  %v269 = vunpack.c.l.b16 %v22
  %v270 = vunpack.c.l.b16 %v23
  %v271 = vunpack.c.h.b16 %v23
  %v272 = vunpack.c.l.b16 %v24
  %v273 = vunpack.c.l.b16 %v25
  %v274 = vunpack.c.h.b16 %v25
  %v275 = vunpack.c.l.b16 %v26
  %v276 = vunpack.c.l.b16 %v27
  %v277 = vunpack.c.h.b16 %v27
  %v278 = vunpack.c.l.b16 %v28
  %v279 = vunpack.c.l.b16 %v29
  %v280 = vunpack.c.h.b16 %v29
  %v281 = vunpack.c.l.b16 %v30
  %v282 = vunpack.c.l.b16 %v31
  %v283 = vunpack.c.h.b16 %v31
  %v284 = vunpack.c.l.b16 %v32
  %v285 = vunpack.c.l.b16 %v33
  %v286 = vunpack.c.h.b16 %v33
  %v287 = vunpack.c.l.b16 %v34
  %v288 = vunpack.c.l.b16 %v35
  %v289 = vunpack.c.h.b16 %v35
  %v290 = vunpack.c.l.b16 %v36
  %v291 = vunpack.c.l.b16 %v37
  %v292 = vunpack.c.h.b16 %v37
  %v293 = vunpack.c.l.b16 %v38
  %v294 = vunpack.c.l.b16 %v39
  %v295 = vunpack.c.h.b16 %v39
  %v296 = vunpack.c.l.b16 %v40
  %v297 = vunpack.c.l.b16 %v41
  %v298 = vunpack.c.h.b16 %v41
  %v299 = vunpack.c.l.b16 %v42
  %v300 = vunpack.c.l.b16 %v43
  %v301 = vunpack.c.h.b16 %v43
  %v302 = vunpack.c.l.b16 %v44
  %v303 = vunpack.c.l.b16 %v45
  %v304 = vunpack.c.h.b16 %v45
  %v305 = vunpack.c.l.b16 %v46
  %v306 = vunpack.c.l.b16 %v47
  %v307 = vunpack.c.h.b16 %v47
  %v308 = vunpack.c.l.b16 %v48
  %v309 = vunpack.c.l.b16 %v49
  %v310 = vunpack.c.h.b16 %v49
  %v311 = vunpack.c.l.b16 %v50
  %v312 = vunpack.c.l.b16 %v51
  %v313 = vunpack.c.h.b16 %v51
  %v314 = vunpack.c.l.b16 %v52
  %v315 = vunpack.c.l.b16 %v53
  %v316 = vunpack.c.h.b16 %v53
  %v317 = vunpack.c.l.b16 %v54
  %v318 = vunpack.c.l.b16 %v55
  %v319 = vunpack.c.h.b16 %v55
  %v320 = vunpack.c.l.b16 %v56
  %v321 = vunpack.c.l.b16 %v57
  %v322 = vunpack.c.h.b16 %v57
  %v323 = vunpack.c.l.b16 %v58
  %v324 = vunpack.c.l.b16 %v59
  %v325 = vunpack.c.h.b16 %v59
  %v326 = vunpack.c.l.b16 %v60
  %v327 = vunpack.c.l.b16 %v61
  %v328 = vunpack.c.h.b16 %v61
  %v329 = vunpack.c.l.b16 %v62
  %v330 = vunpack.c.l.b16 %v63
  %v331 = vunpack.c.h.b16 %v63
  %v332 = vunpack.c.l.b16 %v64
  %v333 = vunpack.c.l.b16 %v65
  %v334 = vunpack.c.h.b16 %v65
  %v335 = vunpack.c.l.b16 %v66
  %v336 = vunpack.c.l.b16 %v67
  %v337 = vunpack.c.h.b16 %v67
  %v338 = vunpack.c.l.b16 %v68
  %v339 = vunpack.c.l.b16 %v69
  %v340 = vunpack.c.h.b16 %v69
  %v341 = vunpack.c.l.b16 %v70
  %v342 = vunpack.c.l.b16 %v71
  %v343 = vunpack.c.h.b16 %v71
  %v344 = vunpack.c.l.b16 %v72
  %v345 = vunpack.c.l.b16 %v73
  %v346 = vunpack.c.h.b16 %v73
  %v347 = vunpack.c.l.b16 %v74
  %v348 = vunpack.c.l.b16 %v75
  %v349 = vunpack.c.h.b16 %v75
  %v350 = vunpack.c.l.b16 %v76
  %v351 = vunpack.c.l.b16 %v77
  %v352 = vunpack.c.h.b16 %v77
  %v353 = vunpack.c.l.b16 %v78
  %v354 = vunpack.c.l.b16 %v79
  %v355 = vunpack.c.h.b16 %v79
  %v356 = vunpack.c.l.b16 %v80
  %v357 = vunpack.c.l.b16 %v81
  %v358 = vunpack.c.h.b16 %v81
  %v359 = vunpack.c.l.b16 %v82
  %v360 = vunpack.c.l.b16 %v83
  %v361 = vunpack.c.h.b16 %v83
  %v362 = vunpack.c.l.b16 %v84
  %v363 = vpack.c.b16 %v270, %v267
  %v364 = vpack.c.b16 %v271, %v268
  %v365 = vpack.c.b16 %v272, %v269
  %v366 = vpack.c.b16 %v276, %v273
  %v367 = vpack.c.b16 %v277, %v274
  %v368 = vpack.c.b16 %v278, %v275
  %v369 = vpack.c.b16 %v282, %v279
  %v370 = vpack.c.b16 %v283, %v280
  %v371 = vpack.c.b16 %v284, %v281
  %v372 = vpack.c.b16 %v288, %v285
  %v373 = vpack.c.b16 %v289, %v286
  %v374 = vpack.c.b16 %v290, %v287
  %v375 = vpack.c.b16 %v294, %v291
  %v376 = vpack.c.b16 %v295, %v292
  %v377 = vpack.c.b16 %v296, %v293
  %v378 = vpack.c.b16 %v300, %v297
  %v379 = vpack.c.b16 %v301, %v298
  %v380 = vpack.c.b16 %v302, %v299
  %v381 = vpack.c.b16 %v306, %v303
  %v382 = vpack.c.b16 %v307, %v304
  %v383 = vpack.c.b16 %v308, %v305
  %v384 = vpack.c.b16 %v312, %v309
  %v385 = vpack.c.b16 %v313, %v310
  %v386 = vpack.c.b16 %v314, %v311
  %v387 = vpack.c.b16 %v318, %v315
  %v388 = vpack.c.b16 %v319, %v316
  %v389 = vpack.c.b16 %v320, %v317
  %v390 = vpack.c.b16 %v324, %v321
  %v391 = vpack.c.b16 %v325, %v322
  %v392 = vpack.c.b16 %v326, %v323
  %v393 = vpack.c.b16 %v330, %v327
  %v394 = vpack.c.b16 %v331, %v328
  %v395 = vpack.c.b16 %v332, %v329
  %v396 = vpack.c.b16 %v336, %v333
  %v397 = vpack.c.b16 %v337, %v334
  %v398 = vpack.c.b16 %v338, %v335
  %v399 = vpack.c.b16 %v342, %v339
  %v400 = vpack.c.b16 %v343, %v340
  %v401 = vpack.c.b16 %v344, %v341
  %v402 = vpack.c.b16 %v348, %v345
  %v403 = vpack.c.b16 %v349, %v346
  %v404 = vpack.c.b16 %v350, %v347
  %v405 = vpack.c.b16 %v354, %v351
  %v406 = vpack.c.b16 %v355, %v352
  %v407 = vpack.c.b16 %v356, %v353
  %v408 = vpack.c.b16 %v360, %v357
  %v409 = vpack.c.b16 %v361, %v358
  %v410 = vpack.c.b16 %v362, %v359
  %v555 = vunpack.c.l.b16 %v85
  %v556 = vunpack.c.h.b16 %v85
  %v557 = vunpack.c.l.b16 %v86
  %v558 = vunpack.c.h.b16 %v86
  %v559 = vunpack.c.l.b16 %v87
  %v560 = vunpack.c.h.b16 %v87
  %v561 = vunpack.c.l.b16 %v88
  %v562 = vunpack.c.h.b16 %v88
  %v563 = vunpack.c.l.b16 %v89
  %v564 = vunpack.c.h.b16 %v89
  %v565 = vunpack.c.l.b16 %v90
  %v566 = vunpack.c.h.b16 %v90
  %v567 = vunpack.c.l.b16 %v91
  %v568 = vunpack.c.h.b16 %v91
  %v569 = vunpack.c.l.b16 %v92
  %v570 = vunpack.c.h.b16 %v92
  %v571 = vunpack.c.l.b16 %v93
  %v572 = vunpack.c.h.b16 %v93
  %v573 = vunpack.c.l.b16 %v94
  %v574 = vunpack.c.h.b16 %v94
  %v575 = vunpack.c.l.b16 %v95
  %v576 = vunpack.c.h.b16 %v95
  %v577 = vunpack.c.l.b16 %v96
  %v578 = vunpack.c.h.b16 %v96
  %v579 = vunpack.c.l.b16 %v97
  %v580 = vunpack.c.h.b16 %v97
  %v581 = vunpack.c.l.b16 %v98
  %v582 = vunpack.c.h.b16 %v98
  %v583 = vunpack.c.l.b16 %v99
  %v584 = vunpack.c.h.b16 %v99
  %v585 = vunpack.c.l.b16 %v100
  %v586 = vunpack.c.h.b16 %v100
  %v587 = vunpack.c.l.b16 %v101
  %v588 = vunpack.c.h.b16 %v101
  %v589 = vunpack.c.l.b16 %v102
  %v590 = vunpack.c.h.b16 %v102
  %v591 = vunpack.c.l.b16 %v103
  %v592 = vunpack.c.h.b16 %v103
  %v593 = vunpack.c.l.b16 %v104
  %v594 = vunpack.c.h.b16 %v104
  %v595 = vunpack.c.l.b16 %v105
  %v596 = vunpack.c.h.b16 %v105
  %v597 = vunpack.c.l.b16 %v106
  %v598 = vunpack.c.h.b16 %v106
  %v599 = vunpack.c.l.b16 %v107
  %v600 = vunpack.c.h.b16 %v107
  %v601 = vunpack.c.l.b16 %v108
  %v602 = vunpack.c.h.b16 %v108
  %v603 = vunpack.c.l.b16 %v109
  %v604 = vunpack.c.h.b16 %v109
  %v605 = vunpack.c.l.b16 %v110
  %v606 = vunpack.c.h.b16 %v110
  %v607 = vunpack.c.l.b16 %v111
  %v608 = vunpack.c.h.b16 %v111
  %v609 = vunpack.c.l.b16 %v112
  %v610 = vunpack.c.h.b16 %v112
  %v611 = vunpack.c.l.b16 %v113
  %v612 = vunpack.c.h.b16 %v113
  %v613 = vunpack.c.l.b16 %v114
  %v614 = vunpack.c.h.b16 %v114
  %v615 = vunpack.c.l.b16 %v115
  %v616 = vunpack.c.h.b16 %v115
  %v617 = vunpack.c.l.b16 %v116
  %v618 = vunpack.c.h.b16 %v116
  %v619 = vunpack.c.l.b16 %v117
  %v620 = vunpack.c.h.b16 %v117
  %v621 = vunpack.c.l.b16 %v118
  %v622 = vunpack.c.h.b16 %v118
  %v623 = vunpack.c.l.b16 %v119
  %v624 = vunpack.c.h.b16 %v119
  %v625 = vunpack.c.l.b16 %v120
  %v626 = vunpack.c.h.b16 %v120
  %v627 = vunpack.c.l.b16 %v121
  %v628 = vunpack.c.h.b16 %v121
  %v629 = vunpack.c.l.b16 %v122
  %v630 = vunpack.c.h.b16 %v122
  %v631 = vunpack.c.l.b16 %v123
  %v632 = vunpack.c.h.b16 %v123
  %v633 = vunpack.c.l.b16 %v124
  %v634 = vunpack.c.h.b16 %v124
  %v635 = vunpack.c.l.b16 %v125
  %v636 = vunpack.c.h.b16 %v125
  %v637 = vunpack.c.l.b16 %v126
  %v638 = vunpack.c.h.b16 %v126
  %v639 = vunpack.c.l.b16 %v127
  %v640 = vunpack.c.h.b16 %v127
  %v641 = vunpack.c.l.b16 %v128
  %v642 = vunpack.c.h.b16 %v128
  %v643 = vunpack.c.l.b16 %v129
  %v644 = vunpack.c.h.b16 %v129
  %v645 = vunpack.c.l.b16 %v130
  %v646 = vunpack.c.h.b16 %v130
  %v647 = vunpack.c.l.b16 %v131
  %v648 = vunpack.c.h.b16 %v131
  %v649 = vunpack.c.l.b16 %v132
  %v650 = vunpack.c.h.b16 %v132
  %v651 = vunpack.c.l.b16 %v133
  %v652 = vunpack.c.h.b16 %v133
  %v653 = vunpack.c.l.b16 %v134
  %v654 = vunpack.c.h.b16 %v134
  %v655 = vunpack.c.l.b16 %v135
  %v656 = vunpack.c.h.b16 %v135
  %v657 = vunpack.c.l.b16 %v136
  %v658 = vunpack.c.h.b16 %v136
  %v659 = vunpack.c.l.b16 %v137
  %v660 = vunpack.c.h.b16 %v137
  %v661 = vunpack.c.l.b16 %v138
  %v662 = vunpack.c.h.b16 %v138
  %v663 = vunpack.c.l.b16 %v139
  %v664 = vunpack.c.h.b16 %v139
  %v665 = vunpack.c.l.b16 %v140
  %v666 = vunpack.c.h.b16 %v140
  %v667 = vunpack.c.l.b16 %v141
  %v668 = vunpack.c.h.b16 %v141
  %v669 = vunpack.c.l.b16 %v142
  %v670 = vunpack.c.h.b16 %v142
  %v671 = vunpack.c.l.b16 %v143
  %v672 = vunpack.c.h.b16 %v143
  %v673 = vunpack.c.l.b16 %v144
  %v674 = vunpack.c.h.b16 %v144
  %v675 = vunpack.c.l.b16 %v145
  %v676 = vunpack.c.h.b16 %v145
  %v677 = vunpack.c.l.b16 %v146
  %v678 = vunpack.c.h.b16 %v146
  %v679 = vunpack.c.l.b16 %v147
  %v680 = vunpack.c.h.b16 %v147
  %v681 = vunpack.c.l.b16 %v148
  %v682 = vunpack.c.h.b16 %v148
  %v683 = vunpack.c.l.b16 %v149
  %v684 = vunpack.c.h.b16 %v149
  %v685 = vunpack.c.l.b16 %v150
  %v686 = vunpack.c.h.b16 %v150
  %v687 = vunpack.c.l.b16 %v151
  %v688 = vunpack.c.h.b16 %v151
  %v689 = vunpack.c.l.b16 %v152
  %v690 = vunpack.c.h.b16 %v152
  %v691 = vunpack.c.l.b16 %v153
  %v692 = vunpack.c.h.b16 %v153
  %v693 = vunpack.c.l.b16 %v154
  %v694 = vunpack.c.h.b16 %v154
  %v695 = vunpack.c.l.b16 %v155
  %v696 = vunpack.c.h.b16 %v155
  %v697 = vunpack.c.l.b16 %v156
  %v698 = vunpack.c.h.b16 %v156
  %v699 = vunpack.c.l.b16 %v157
  %v700 = vunpack.c.h.b16 %v157
  %v701 = vunpack.c.l.b16 %v158
  %v702 = vunpack.c.h.b16 %v158
  %v703 = vunpack.c.l.b16 %v159
  %v704 = vunpack.c.h.b16 %v159
  %v705 = vunpack.c.l.b16 %v160
  %v706 = vunpack.c.h.b16 %v160
  %v707 = vunpack.c.l.b16 %v161
  %v708 = vunpack.c.h.b16 %v161
  %v709 = vunpack.c.l.b16 %v162
  %v710 = vunpack.c.h.b16 %v162
  %v711 = vunpack.c.l.b16 %v163
  %v712 = vunpack.c.h.b16 %v163
  %v713 = vunpack.c.l.b16 %v164
  %v714 = vunpack.c.h.b16 %v164
  %v715 = vunpack.c.l.b16 %v165
  %v716 = vunpack.c.h.b16 %v165
  %v717 = vunpack.c.l.b16 %v166
  %v718 = vunpack.c.h.b16 %v166
  %v719 = vunpack.c.l.b16 %v167
  %v720 = vunpack.c.h.b16 %v167
  %v721 = vunpack.c.l.b16 %v168
  %v722 = vunpack.c.h.b16 %v168
  %v723 = vunpack.c.l.b16 %v169
  %v724 = vunpack.c.h.b16 %v169
  %v725 = vunpack.c.l.b16 %v170
  %v726 = vunpack.c.h.b16 %v170
  %v727 = vunpack.c.l.b16 %v171
  %v728 = vunpack.c.h.b16 %v171
  %v729 = vunpack.c.l.b16 %v172
  %v730 = vunpack.c.h.b16 %v172
  %v731 = vunpack.c.l.b16 %v173
  %v732 = vunpack.c.h.b16 %v173
  %v733 = vunpack.c.l.b16 %v174
  %v734 = vunpack.c.h.b16 %v174
  %v735 = vunpack.c.l.b16 %v175
  %v736 = vunpack.c.h.b16 %v175
  %v737 = vunpack.c.l.b16 %v176
  %v738 = vunpack.c.h.b16 %v176
  %v739 = vunpack.c.l.b16 %v177
  %v740 = vunpack.c.h.b16 %v177
  %v741 = vunpack.c.l.b16 %v178
  %v742 = vunpack.c.h.b16 %v178
  %v743 = vunpack.c.l.b16 %v179
  %v744 = vunpack.c.h.b16 %v179
  %v745 = vunpack.c.l.b16 %v180
  %v746 = vunpack.c.h.b16 %v180
  %v747 = vpack.c.b16 %v559, %v555
  %v748 = vpack.c.b16 %v560, %v556
  %v749 = vpack.c.b16 %v561, %v557
  %v750 = vpack.c.b16 %v562, %v558
  %v751 = vpack.c.b16 %v567, %v563
  %v752 = vpack.c.b16 %v568, %v564
  %v753 = vpack.c.b16 %v569, %v565
  %v754 = vpack.c.b16 %v570, %v566
  %v755 = vpack.c.b16 %v575, %v571
  %v756 = vpack.c.b16 %v576, %v572
  %v757 = vpack.c.b16 %v577, %v573
  %v758 = vpack.c.b16 %v578, %v574
  %v759 = vpack.c.b16 %v583, %v579
  %v760 = vpack.c.b16 %v584, %v580
  %v761 = vpack.c.b16 %v585, %v581
  %v762 = vpack.c.b16 %v586, %v582
  %v763 = vpack.c.b16 %v591, %v587
  %v764 = vpack.c.b16 %v592, %v588
  %v765 = vpack.c.b16 %v593, %v589
  %v766 = vpack.c.b16 %v594, %v590
  %v767 = vpack.c.b16 %v599, %v595
  %v768 = vpack.c.b16 %v600, %v596
  %v769 = vpack.c.b16 %v601, %v597
  %v770 = vpack.c.b16 %v602, %v598
  %v771 = vpack.c.b16 %v607, %v603
  %v772 = vpack.c.b16 %v608, %v604
  %v773 = vpack.c.b16 %v609, %v605
  %v774 = vpack.c.b16 %v610, %v606
  %v775 = vpack.c.b16 %v615, %v611
  %v776 = vpack.c.b16 %v616, %v612
  %v777 = vpack.c.b16 %v617, %v613
  %v778 = vpack.c.b16 %v618, %v614
  %v779 = vpack.c.b16 %v623, %v619
  %v780 = vpack.c.b16 %v624, %v620
  %v781 = vpack.c.b16 %v625, %v621
  %v782 = vpack.c.b16 %v626, %v622
  %v783 = vpack.c.b16 %v631, %v627
  %v784 = vpack.c.b16 %v632, %v628
  %v785 = vpack.c.b16 %v633, %v629
  %v786 = vpack.c.b16 %v634, %v630
  %v787 = vpack.c.b16 %v639, %v635
  %v788 = vpack.c.b16 %v640, %v636
  %v789 = vpack.c.b16 %v641, %v637
  %v790 = vpack.c.b16 %v642, %v638
  %v791 = vpack.c.b16 %v647, %v643
  %v792 = vpack.c.b16 %v648, %v644
  %v793 = vpack.c.b16 %v649, %v645
  %v794 = vpack.c.b16 %v650, %v646
  %v795 = vpack.c.b16 %v655, %v651
  %v796 = vpack.c.b16 %v656, %v652
  %v797 = vpack.c.b16 %v657, %v653
  %v798 = vpack.c.b16 %v658, %v654
  %v799 = vpack.c.b16 %v663, %v659
  %v800 = vpack.c.b16 %v664, %v660
  %v801 = vpack.c.b16 %v665, %v661
  %v802 = vpack.c.b16 %v666, %v662
  %v803 = vpack.c.b16 %v671, %v667
  %v804 = vpack.c.b16 %v672, %v668
  %v805 = vpack.c.b16 %v673, %v669
  %v806 = vpack.c.b16 %v674, %v670
  %v807 = vpack.c.b16 %v679, %v675
  %v808 = vpack.c.b16 %v680, %v676
  %v809 = vpack.c.b16 %v681, %v677
  %v810 = vpack.c.b16 %v682, %v678
  %v811 = vpack.c.b16 %v687, %v683
  %v812 = vpack.c.b16 %v688, %v684
  %v813 = vpack.c.b16 %v689, %v685
  %v814 = vpack.c.b16 %v690, %v686
  %v815 = vpack.c.b16 %v695, %v691
  %v816 = vpack.c.b16 %v696, %v692
  %v817 = vpack.c.b16 %v697, %v693
  %v818 = vpack.c.b16 %v698, %v694
  %v819 = vpack.c.b16 %v703, %v699
  %v820 = vpack.c.b16 %v704, %v700
  %v821 = vpack.c.b16 %v705, %v701
  %v822 = vpack.c.b16 %v706, %v702
  %v823 = vpack.c.b16 %v711, %v707
  %v824 = vpack.c.b16 %v712, %v708
  %v825 = vpack.c.b16 %v713, %v709
  %v826 = vpack.c.b16 %v714, %v710
  %v827 = vpack.c.b16 %v719, %v715
  %v828 = vpack.c.b16 %v720, %v716
  %v829 = vpack.c.b16 %v721, %v717
  %v830 = vpack.c.b16 %v722, %v718
  %v831 = vpack.c.b16 %v727, %v723
  %v832 = vpack.c.b16 %v728, %v724
  %v833 = vpack.c.b16 %v729, %v725
  %v834 = vpack.c.b16 %v730, %v726
  %v835 = vpack.c.b16 %v735, %v731
  %v836 = vpack.c.b16 %v736, %v732
  %v837 = vpack.c.b16 %v737, %v733
  %v838 = vpack.c.b16 %v738, %v734
  %v839 = vpack.c.b16 %v743, %v739
  %v840 = vpack.c.b16 %v744, %v740
  %v841 = vpack.c.b16 %v745, %v741
  %v842 = vpack.c.b16 %v746, %v742
  %939 = vmatprep.subr.bf16.mxu0 %v776
  %940 = vmatpush1.bf16.msra.mxu0 %v775
  %941 = vmatprep.subr.bf16.mxu0 %v772
  %942 = vmatpush1.bf16.msra.mxu0 %v771
  %943 = vmatprep.subr.bf16.mxu0 %v768
  %944 = vmatpush1.bf16.msra.mxu0 %v767
  %945 = vmatprep.subr.bf16.mxu0 %v764
  %946 = vmatpush1.bf16.msra.mxu0 %v763
  %947 = vmatprep.subr.bf16.mxu0 %v760
  %948 = vmatpush1.bf16.msra.mxu0 %v759
  %949 = vmatprep.subr.bf16.mxu0 %v756
  %950 = vmatpush1.bf16.msra.mxu0 %v755
  %951 = vmatprep.subr.bf16.mxu0 %v752
  %952 = vmatpush1.bf16.msra.mxu0 %v751
  %953 = vmatprep.subr.bf16.mxu0 %v748
  %954 = vmatpush1.bf16.msra.mxu0 %v747
  %955 = vmatprep.subr.bf16.mxu0 %v808
  %956 = vmatpush2.bf16.msra.mxu0 %v807
  %957 = vmatprep.subr.bf16.mxu0 %v804
  %958 = vmatpush2.bf16.msra.mxu0 %v803
  %959 = vmatprep.subr.bf16.mxu0 %v800
  %960 = vmatpush2.bf16.msra.mxu0 %v799
  %961 = vmatprep.subr.bf16.mxu0 %v796
  %962 = vmatpush2.bf16.msra.mxu0 %v795
  %963 = vmatprep.subr.bf16.mxu0 %v792
  %964 = vmatpush2.bf16.msra.mxu0 %v791
  %965 = vmatprep.subr.bf16.mxu0 %v788
  %966 = vmatpush2.bf16.msra.mxu0 %v787
  %967 = vmatprep.subr.bf16.mxu0 %v784
  %968 = vmatpush2.bf16.msra.mxu0 %v783
  %969 = vmatprep.subr.bf16.mxu0 %v780
  %970 = vmatpush2.bf16.msra.mxu0 %v779
  %971 = vmatprep.mubr.bf16.mxu0 %v364
  %972 = vmatmul.mubr.bf16.gmra.mxu0 %v363
  %v973 = vpop.f32.mrf.mxu0
  %v974 = vadd.f32 %v186, %v973
  %v975 = vpop.f32.mrf.mxu0
  %v976 = vadd.f32 %v190, %v975
  %v977 = vpop.f32.mrf.mxu0
  %v978 = vadd.f32 %v186, %v977
  %v979 = vpop.f32.mrf.mxu0
  %v980 = vadd.f32 %v190, %v979
  %981 = vmatprep.mubr.bf16.mxu0 %v367
  %982 = vmatmul.mubr.bf16.gmra.mxu0 %v366
  %v983 = vpop.f32.mrf.mxu0
  %v984 = vadd.f32 %v186, %v983
  %v985 = vpop.f32.mrf.mxu0
  %v986 = vadd.f32 %v190, %v985
  %v987 = vpop.f32.mrf.mxu0
  %v988 = vadd.f32 %v186, %v987
  %v989 = vpop.f32.mrf.mxu0
  %v990 = vadd.f32 %v190, %v989
  %991 = vmatprep.mubr.bf16.mxu0 %v370
  %992 = vmatmul.mubr.bf16.gmra.mxu0 %v369
  %v993 = vpop.f32.mrf.mxu0
  %v994 = vadd.f32 %v186, %v993
  %v995 = vpop.f32.mrf.mxu0
  %v996 = vadd.f32 %v190, %v995
  %v997 = vpop.f32.mrf.mxu0
  %v998 = vadd.f32 %v186, %v997
  %v999 = vpop.f32.mrf.mxu0
  %v1000 = vadd.f32 %v190, %v999
  %1001 = vmatprep.mubr.bf16.mxu0 %v373
  %1002 = vmatmul.mubr.bf16.gmra.mxu0 %v372
  %v1003 = vpop.f32.mrf.mxu0
  %v1004 = vadd.f32 %v186, %v1003
  %v1005 = vpop.f32.mrf.mxu0
  %v1006 = vadd.f32 %v190, %v1005
  %v1007 = vpop.f32.mrf.mxu0
  %v1008 = vadd.f32 %v186, %v1007
  %v1009 = vpop.f32.mrf.mxu0
  %v1010 = vadd.f32 %v190, %v1009
  %1011 = vmatprep.mubr.bf16.mxu0 %v376
  %1012 = vmatmul.mubr.bf16.gmra.mxu0 %v375
  %v1013 = vpop.f32.mrf.mxu0
  %v1014 = vadd.f32 %v186, %v1013
  %v1015 = vpop.f32.mrf.mxu0
  %v1016 = vadd.f32 %v190, %v1015
  %v1017 = vpop.f32.mrf.mxu0
  %v1018 = vadd.f32 %v186, %v1017
  %v1019 = vpop.f32.mrf.mxu0
  %v1020 = vadd.f32 %v190, %v1019
  %1021 = vmatprep.mubr.bf16.mxu0 %v379
  %1022 = vmatmul.mubr.bf16.gmra.mxu0 %v378
  %v1023 = vpop.f32.mrf.mxu0
  %v1024 = vadd.f32 %v186, %v1023
  %v1025 = vpop.f32.mrf.mxu0
  %v1026 = vadd.f32 %v190, %v1025
  %v1027 = vpop.f32.mrf.mxu0
  %v1028 = vadd.f32 %v186, %v1027
  %v1029 = vpop.f32.mrf.mxu0
  %v1030 = vadd.f32 %v190, %v1029
  %1031 = vmatprep.mubr.bf16.mxu0 %v382
  %1032 = vmatmul.mubr.bf16.gmra.mxu0 %v381
  %v1033 = vpop.f32.mrf.mxu0
  %v1034 = vadd.f32 %v186, %v1033
  %v1035 = vpop.f32.mrf.mxu0
  %v1036 = vadd.f32 %v190, %v1035
  %v1037 = vpop.f32.mrf.mxu0
  %v1038 = vadd.f32 %v186, %v1037
  %v1039 = vpop.f32.mrf.mxu0
  %v1040 = vadd.f32 %v190, %v1039
  %1041 = vmatprep.mubr.bf16.mxu0 %v385
  %1042 = vmatmul.mubr.bf16.gmra.mxu0 %v384
  %v1043 = vpop.f32.mrf.mxu0
  %v1044 = vadd.f32 %v186, %v1043
  %v1045 = vpop.f32.mrf.mxu0
  %v1046 = vadd.f32 %v190, %v1045
  %v1047 = vpop.f32.mrf.mxu0
  %v1048 = vadd.f32 %v186, %v1047
  %v1049 = vpop.f32.mrf.mxu0
  %v1050 = vadd.f32 %v190, %v1049
  %1051 = vmatprep.mubr.bf16.mxu0 %v388
  %1052 = vmatmul.mubr.bf16.gmra.mxu0 %v387
  %v1053 = vpop.f32.mrf.mxu0
  %v1054 = vadd.f32 %v186, %v1053
  %v1055 = vpop.f32.mrf.mxu0
  %v1056 = vadd.f32 %v190, %v1055
  %v1057 = vpop.f32.mrf.mxu0
  %v1058 = vadd.f32 %v186, %v1057
  %v1059 = vpop.f32.mrf.mxu0
  %v1060 = vadd.f32 %v190, %v1059
  %1061 = vmatprep.mubr.bf16.mxu0 %v391
  %1062 = vmatmul.mubr.bf16.gmra.mxu0 %v390
  %v1063 = vpop.f32.mrf.mxu0
  %v1064 = vadd.f32 %v186, %v1063
  %v1065 = vpop.f32.mrf.mxu0
  %v1066 = vadd.f32 %v190, %v1065
  %v1067 = vpop.f32.mrf.mxu0
  %v1068 = vadd.f32 %v186, %v1067
  %v1069 = vpop.f32.mrf.mxu0
  %v1070 = vadd.f32 %v190, %v1069
  %1071 = vmatprep.mubr.bf16.mxu0 %v394
  %1072 = vmatmul.mubr.bf16.gmra.mxu0 %v393
  %v1073 = vpop.f32.mrf.mxu0
  %v1074 = vadd.f32 %v186, %v1073
  %v1075 = vpop.f32.mrf.mxu0
  %v1076 = vadd.f32 %v190, %v1075
  %v1077 = vpop.f32.mrf.mxu0
  %v1078 = vadd.f32 %v186, %v1077
  %v1079 = vpop.f32.mrf.mxu0
  %v1080 = vadd.f32 %v190, %v1079
  %1081 = vmatprep.mubr.bf16.mxu0 %v397
  %1082 = vmatmul.mubr.bf16.gmra.mxu0 %v396
  %v1083 = vpop.f32.mrf.mxu0
  %v1084 = vadd.f32 %v186, %v1083
  %v1085 = vpop.f32.mrf.mxu0
  %v1086 = vadd.f32 %v190, %v1085
  %v1087 = vpop.f32.mrf.mxu0
  %v1088 = vadd.f32 %v186, %v1087
  %v1089 = vpop.f32.mrf.mxu0
  %v1090 = vadd.f32 %v190, %v1089
  %1091 = vmatprep.mubr.bf16.mxu0 %v400
  %1092 = vmatmul.mubr.bf16.gmra.mxu0 %v399
  %v1093 = vpop.f32.mrf.mxu0
  %v1094 = vadd.f32 %v186, %v1093
  %v1095 = vpop.f32.mrf.mxu0
  %v1096 = vadd.f32 %v190, %v1095
  %v1097 = vpop.f32.mrf.mxu0
  %v1098 = vadd.f32 %v186, %v1097
  %v1099 = vpop.f32.mrf.mxu0
  %v1100 = vadd.f32 %v190, %v1099
  %1101 = vmatprep.mubr.bf16.mxu0 %v403
  %1102 = vmatmul.mubr.bf16.gmra.mxu0 %v402
  %v1103 = vpop.f32.mrf.mxu0
  %v1104 = vadd.f32 %v186, %v1103
  %v1105 = vpop.f32.mrf.mxu0
  %v1106 = vadd.f32 %v190, %v1105
  %v1107 = vpop.f32.mrf.mxu0
  %v1108 = vadd.f32 %v186, %v1107
  %v1109 = vpop.f32.mrf.mxu0
  %v1110 = vadd.f32 %v190, %v1109
  %1111 = vmatprep.mubr.bf16.mxu0 %v406
  %1112 = vmatmul.mubr.bf16.gmra.mxu0 %v405
  %v1113 = vpop.f32.mrf.mxu0
  %v1114 = vadd.f32 %v186, %v1113
  %v1115 = vpop.f32.mrf.mxu0
  %v1116 = vadd.f32 %v190, %v1115
  %v1117 = vpop.f32.mrf.mxu0
  %v1118 = vadd.f32 %v186, %v1117
  %v1119 = vpop.f32.mrf.mxu0
  %v1120 = vadd.f32 %v190, %v1119
  %1121 = vmatprep.mubr.bf16.mxu0 %v409
  %1122 = vmatmul.mubr.bf16.gmra.mxu0 %v408
  %v1123 = vpop.f32.mrf.mxu0
  %v1124 = vadd.f32 %v186, %v1123
  %v1125 = vpop.f32.mrf.mxu0
  %v1126 = vadd.f32 %v190, %v1125
  %v1127 = vpop.f32.mrf.mxu0
  %v1128 = vadd.f32 %v186, %v1127
  %v1129 = vpop.f32.mrf.mxu0
  %v1130 = vadd.f32 %v190, %v1129
  %1131 = vdwg.mxu0
  %1132 = vmatprep.subr.bf16.mxu0 %v840
  %1133 = vmatpush1.bf16.msra.mxu0 %v839
  %1134 = vmatprep.subr.bf16.mxu0 %v836
  %1135 = vmatpush1.bf16.msra.mxu0 %v835
  %1136 = vmatprep.subr.bf16.mxu0 %v832
  %1137 = vmatpush1.bf16.msra.mxu0 %v831
  %1138 = vmatprep.subr.bf16.mxu0 %v828
  %1139 = vmatpush1.bf16.msra.mxu0 %v827
  %1140 = vmatprep.subr.bf16.mxu0 %v824
  %1141 = vmatpush1.bf16.msra.mxu0 %v823
  %1142 = vmatprep.subr.bf16.mxu0 %v820
  %1143 = vmatpush1.bf16.msra.mxu0 %v819
  %1144 = vmatprep.subr.bf16.mxu0 %v816
  %1145 = vmatpush1.bf16.msra.mxu0 %v815
  %1146 = vmatprep.subr.bf16.mxu0 %v812
  %1147 = vmatpush1.bf16.msra.mxu0 %v811
  %1148 = vmatprep.subr.bf16.mxu0 0
  %1149 = vmatpush2.bf16.msra.mxu0 0
  %1150 = vmatprep.subr.bf16.mxu0 0
  %1151 = vmatpush2.bf16.msra.mxu0 0
  %1152 = vmatprep.subr.bf16.mxu0 0
  %1153 = vmatpush2.bf16.msra.mxu0 0
  %1154 = vmatprep.subr.bf16.mxu0 0
  %1155 = vmatpush2.bf16.msra.mxu0 0
  %1156 = vmatprep.subr.bf16.mxu0 0
  %1157 = vmatpush2.bf16.msra.mxu0 0
  %1158 = vmatprep.subr.bf16.mxu0 0
  %1159 = vmatpush2.bf16.msra.mxu0 0
  %1160 = vmatprep.subr.bf16.mxu0 0
  %1161 = vmatpush2.bf16.msra.mxu0 0
  %1162 = vmatprep.subr.bf16.mxu0 0
  %1163 = vmatpush2.bf16.msra.mxu0 0
  %1164 = vmatprep.mubr.bf16.mxu0 0
  %1165 = vmatmul.mubr.bf16.gmra.mxu0 %v365
  %v1166 = vpop.f32.mrf.mxu0
  %v1167 = vadd.f32 %v974, %v1166
  %v1168 = vpop.f32.mrf.mxu0
  %v1169 = vadd.f32 %v976, %v1168
  %v1170 = vpop.f32.mrf.mxu0
  %v1171 = vadd.f32 %v978, %v1170
  %v1172 = vpop.f32.mrf.mxu0
  %v1173 = vadd.f32 %v980, %v1172
  %1174 = vmatprep.mubr.bf16.mxu0 0
  %1175 = vmatmul.mubr.bf16.gmra.mxu0 %v368
  %v1176 = vpop.f32.mrf.mxu0
  %v1177 = vadd.f32 %v984, %v1176
  %v1178 = vpop.f32.mrf.mxu0
  %v1179 = vadd.f32 %v986, %v1178
  %v1180 = vpop.f32.mrf.mxu0
  %v1181 = vadd.f32 %v988, %v1180
  %v1182 = vpop.f32.mrf.mxu0
  %v1183 = vadd.f32 %v990, %v1182
  %1184 = vmatprep.mubr.bf16.mxu0 0
  %1185 = vmatmul.mubr.bf16.gmra.mxu0 %v371
  %v1186 = vpop.f32.mrf.mxu0
  %v1187 = vadd.f32 %v994, %v1186
  %v1188 = vpop.f32.mrf.mxu0
  %v1189 = vadd.f32 %v996, %v1188
  %v1190 = vpop.f32.mrf.mxu0
  %v1191 = vadd.f32 %v998, %v1190
  %v1192 = vpop.f32.mrf.mxu0
  %v1193 = vadd.f32 %v1000, %v1192
  %1194 = vmatprep.mubr.bf16.mxu0 0
  %1195 = vmatmul.mubr.bf16.gmra.mxu0 %v374
  %v1196 = vpop.f32.mrf.mxu0
  %v1197 = vadd.f32 %v1004, %v1196
  %v1198 = vpop.f32.mrf.mxu0
  %v1199 = vadd.f32 %v1006, %v1198
  %v1200 = vpop.f32.mrf.mxu0
  %v1201 = vadd.f32 %v1008, %v1200
  %v1202 = vpop.f32.mrf.mxu0
  %v1203 = vadd.f32 %v1010, %v1202
  %1204 = vmatprep.mubr.bf16.mxu0 0
  %1205 = vmatmul.mubr.bf16.gmra.mxu0 %v377
  %v1206 = vpop.f32.mrf.mxu0
  %v1207 = vadd.f32 %v1014, %v1206
  %v1208 = vpop.f32.mrf.mxu0
  %v1209 = vadd.f32 %v1016, %v1208
  %v1210 = vpop.f32.mrf.mxu0
  %v1211 = vadd.f32 %v1018, %v1210
  %v1212 = vpop.f32.mrf.mxu0
  %v1213 = vadd.f32 %v1020, %v1212
  %1214 = vmatprep.mubr.bf16.mxu0 0
  %1215 = vmatmul.mubr.bf16.gmra.mxu0 %v380
  %v1216 = vpop.f32.mrf.mxu0
  %v1217 = vadd.f32 %v1024, %v1216
  %v1218 = vpop.f32.mrf.mxu0
  %v1219 = vadd.f32 %v1026, %v1218
  %v1220 = vpop.f32.mrf.mxu0
  %v1221 = vadd.f32 %v1028, %v1220
  %v1222 = vpop.f32.mrf.mxu0
  %v1223 = vadd.f32 %v1030, %v1222
  %1224 = vmatprep.mubr.bf16.mxu0 0
  %1225 = vmatmul.mubr.bf16.gmra.mxu0 %v383
  %v1226 = vpop.f32.mrf.mxu0
  %v1227 = vadd.f32 %v1034, %v1226
  %v1228 = vpop.f32.mrf.mxu0
  %v1229 = vadd.f32 %v1036, %v1228
  %v1230 = vpop.f32.mrf.mxu0
  %v1231 = vadd.f32 %v1038, %v1230
  %v1232 = vpop.f32.mrf.mxu0
  %v1233 = vadd.f32 %v1040, %v1232
  %1234 = vmatprep.mubr.bf16.mxu0 0
  %1235 = vmatmul.mubr.bf16.gmra.mxu0 %v386
  %v1236 = vpop.f32.mrf.mxu0
  %v1237 = vadd.f32 %v1044, %v1236
  %v1238 = vpop.f32.mrf.mxu0
  %v1239 = vadd.f32 %v1046, %v1238
  %v1240 = vpop.f32.mrf.mxu0
  %v1241 = vadd.f32 %v1048, %v1240
  %v1242 = vpop.f32.mrf.mxu0
  %v1243 = vadd.f32 %v1050, %v1242
  %1244 = vmatprep.mubr.bf16.mxu0 0
  %1245 = vmatmul.mubr.bf16.gmra.mxu0 %v389
  %v1246 = vpop.f32.mrf.mxu0
  %v1247 = vadd.f32 %v1054, %v1246
  %v1248 = vpop.f32.mrf.mxu0
  %v1249 = vadd.f32 %v1056, %v1248
  %v1250 = vpop.f32.mrf.mxu0
  %v1251 = vadd.f32 %v1058, %v1250
  %v1252 = vpop.f32.mrf.mxu0
  %v1253 = vadd.f32 %v1060, %v1252
  %1254 = vmatprep.mubr.bf16.mxu0 0
  %1255 = vmatmul.mubr.bf16.gmra.mxu0 %v392
  %v1256 = vpop.f32.mrf.mxu0
  %v1257 = vadd.f32 %v1064, %v1256
  %v1258 = vpop.f32.mrf.mxu0
  %v1259 = vadd.f32 %v1066, %v1258
  %v1260 = vpop.f32.mrf.mxu0
  %v1261 = vadd.f32 %v1068, %v1260
  %v1262 = vpop.f32.mrf.mxu0
  %v1263 = vadd.f32 %v1070, %v1262
  %1264 = vmatprep.mubr.bf16.mxu0 0
  %1265 = vmatmul.mubr.bf16.gmra.mxu0 %v395
  %v1266 = vpop.f32.mrf.mxu0
  %v1267 = vadd.f32 %v1074, %v1266
  %v1268 = vpop.f32.mrf.mxu0
  %v1269 = vadd.f32 %v1076, %v1268
  %v1270 = vpop.f32.mrf.mxu0
  %v1271 = vadd.f32 %v1078, %v1270
  %v1272 = vpop.f32.mrf.mxu0
  %v1273 = vadd.f32 %v1080, %v1272
  %1274 = vmatprep.mubr.bf16.mxu0 0
  %1275 = vmatmul.mubr.bf16.gmra.mxu0 %v398
  %v1276 = vpop.f32.mrf.mxu0
  %v1277 = vadd.f32 %v1084, %v1276
  %v1278 = vpop.f32.mrf.mxu0
  %v1279 = vadd.f32 %v1086, %v1278
  %v1280 = vpop.f32.mrf.mxu0
  %v1281 = vadd.f32 %v1088, %v1280
  %v1282 = vpop.f32.mrf.mxu0
  %v1283 = vadd.f32 %v1090, %v1282
  %1284 = vmatprep.mubr.bf16.mxu0 0
  %1285 = vmatmul.mubr.bf16.gmra.mxu0 %v401
  %v1286 = vpop.f32.mrf.mxu0
  %v1287 = vadd.f32 %v1094, %v1286
  %v1288 = vpop.f32.mrf.mxu0
  %v1289 = vadd.f32 %v1096, %v1288
  %v1290 = vpop.f32.mrf.mxu0
  %v1291 = vadd.f32 %v1098, %v1290
  %v1292 = vpop.f32.mrf.mxu0
  %v1293 = vadd.f32 %v1100, %v1292
  %1294 = vmatprep.mubr.bf16.mxu0 0
  %1295 = vmatmul.mubr.bf16.gmra.mxu0 %v404
  %v1296 = vpop.f32.mrf.mxu0
  %v1297 = vadd.f32 %v1104, %v1296
  %v1298 = vpop.f32.mrf.mxu0
  %v1299 = vadd.f32 %v1106, %v1298
  %v1300 = vpop.f32.mrf.mxu0
  %v1301 = vadd.f32 %v1108, %v1300
  %v1302 = vpop.f32.mrf.mxu0
  %v1303 = vadd.f32 %v1110, %v1302
  %1304 = vmatprep.mubr.bf16.mxu0 0
  %1305 = vmatmul.mubr.bf16.gmra.mxu0 %v407
  %v1306 = vpop.f32.mrf.mxu0
  %v1307 = vadd.f32 %v1114, %v1306
  %v1308 = vpop.f32.mrf.mxu0
  %v1309 = vadd.f32 %v1116, %v1308
  %v1310 = vpop.f32.mrf.mxu0
  %v1311 = vadd.f32 %v1118, %v1310
  %v1312 = vpop.f32.mrf.mxu0
  %v1313 = vadd.f32 %v1120, %v1312
  %1314 = vmatprep.mubr.bf16.mxu0 0
  %1315 = vmatmul.mubr.bf16.gmra.mxu0 %v410
  %v1316 = vpop.f32.mrf.mxu0
  %v1317 = vadd.f32 %v1124, %v1316
  %v1318 = vpop.f32.mrf.mxu0
  %v1319 = vadd.f32 %v1126, %v1318
  %v1320 = vpop.f32.mrf.mxu0
  %v1321 = vadd.f32 %v1128, %v1320
  %v1322 = vpop.f32.mrf.mxu0
  %v1323 = vadd.f32 %v1130, %v1322
  %1324 = vdwg.mxu0
  %1325 = vmatprep.subr.bf16.mxu0 %v778
  %1326 = vmatpush1.bf16.msra.mxu0 %v777
  %1327 = vmatprep.subr.bf16.mxu0 %v774
  %1328 = vmatpush1.bf16.msra.mxu0 %v773
  %1329 = vmatprep.subr.bf16.mxu0 %v770
  %1330 = vmatpush1.bf16.msra.mxu0 %v769
  %1331 = vmatprep.subr.bf16.mxu0 %v766
  %1332 = vmatpush1.bf16.msra.mxu0 %v765
  %1333 = vmatprep.subr.bf16.mxu0 %v762
  %1334 = vmatpush1.bf16.msra.mxu0 %v761
  %1335 = vmatprep.subr.bf16.mxu0 %v758
  %1336 = vmatpush1.bf16.msra.mxu0 %v757
  %1337 = vmatprep.subr.bf16.mxu0 %v754
  %1338 = vmatpush1.bf16.msra.mxu0 %v753
  %1339 = vmatprep.subr.bf16.mxu0 %v750
  %1340 = vmatpush1.bf16.msra.mxu0 %v749
  %1341 = vmatprep.subr.bf16.mxu0 %v810
  %1342 = vmatpush2.bf16.msra.mxu0 %v809
  %1343 = vmatprep.subr.bf16.mxu0 %v806
  %1344 = vmatpush2.bf16.msra.mxu0 %v805
  %1345 = vmatprep.subr.bf16.mxu0 %v802
  %1346 = vmatpush2.bf16.msra.mxu0 %v801
  %1347 = vmatprep.subr.bf16.mxu0 %v798
  %1348 = vmatpush2.bf16.msra.mxu0 %v797
  %1349 = vmatprep.subr.bf16.mxu0 %v794
  %1350 = vmatpush2.bf16.msra.mxu0 %v793
  %1351 = vmatprep.subr.bf16.mxu0 %v790
  %1352 = vmatpush2.bf16.msra.mxu0 %v789
  %1353 = vmatprep.subr.bf16.mxu0 %v786
  %1354 = vmatpush2.bf16.msra.mxu0 %v785
  %1355 = vmatprep.subr.bf16.mxu0 %v782
  %1356 = vmatpush2.bf16.msra.mxu0 %v781
  %1357 = vmatprep.mubr.bf16.mxu0 %v364
  %1358 = vmatmul.mubr.bf16.gmra.mxu0 %v363
  %v1359 = vpop.f32.mrf.mxu0
  %v1360 = vadd.f32 %v194, %v1359
  %v1361 = vpop.f32.mrf.mxu0
  %v1362 = vadd.f32 %v198, %v1361
  %v1363 = vpop.f32.mrf.mxu0
  %v1364 = vadd.f32 %v194, %v1363
  %v1365 = vpop.f32.mrf.mxu0
  %v1366 = vadd.f32 %v198, %v1365
  %1367 = vmatprep.mubr.bf16.mxu0 %v367
  %1368 = vmatmul.mubr.bf16.gmra.mxu0 %v366
  %v1369 = vpop.f32.mrf.mxu0
  %v1370 = vadd.f32 %v194, %v1369
  %v1371 = vpop.f32.mrf.mxu0
  %v1372 = vadd.f32 %v198, %v1371
  %v1373 = vpop.f32.mrf.mxu0
  %v1374 = vadd.f32 %v194, %v1373
  %v1375 = vpop.f32.mrf.mxu0
  %v1376 = vadd.f32 %v198, %v1375
  %1377 = vmatprep.mubr.bf16.mxu0 %v370
  %1378 = vmatmul.mubr.bf16.gmra.mxu0 %v369
  %v1379 = vpop.f32.mrf.mxu0
  %v1380 = vadd.f32 %v194, %v1379
  %v1381 = vpop.f32.mrf.mxu0
  %v1382 = vadd.f32 %v198, %v1381
  %v1383 = vpop.f32.mrf.mxu0
  %v1384 = vadd.f32 %v194, %v1383
  %v1385 = vpop.f32.mrf.mxu0
  %v1386 = vadd.f32 %v198, %v1385
  %1387 = vmatprep.mubr.bf16.mxu0 %v373
  %1388 = vmatmul.mubr.bf16.gmra.mxu0 %v372
  %v1389 = vpop.f32.mrf.mxu0
  %v1390 = vadd.f32 %v194, %v1389
  %v1391 = vpop.f32.mrf.mxu0
  %v1392 = vadd.f32 %v198, %v1391
  %v1393 = vpop.f32.mrf.mxu0
  %v1394 = vadd.f32 %v194, %v1393
  %v1395 = vpop.f32.mrf.mxu0
  %v1396 = vadd.f32 %v198, %v1395
  %1397 = vmatprep.mubr.bf16.mxu0 %v376
  %1398 = vmatmul.mubr.bf16.gmra.mxu0 %v375
  %v1399 = vpop.f32.mrf.mxu0
  %v1400 = vadd.f32 %v194, %v1399
  %v1401 = vpop.f32.mrf.mxu0
  %v1402 = vadd.f32 %v198, %v1401
  %v1403 = vpop.f32.mrf.mxu0
  %v1404 = vadd.f32 %v194, %v1403
  %v1405 = vpop.f32.mrf.mxu0
  %v1406 = vadd.f32 %v198, %v1405
  %1407 = vmatprep.mubr.bf16.mxu0 %v379
  %1408 = vmatmul.mubr.bf16.gmra.mxu0 %v378
  %v1409 = vpop.f32.mrf.mxu0
  %v1410 = vadd.f32 %v194, %v1409
  %v1411 = vpop.f32.mrf.mxu0
  %v1412 = vadd.f32 %v198, %v1411
  %v1413 = vpop.f32.mrf.mxu0
  %v1414 = vadd.f32 %v194, %v1413
  %v1415 = vpop.f32.mrf.mxu0
  %v1416 = vadd.f32 %v198, %v1415
  %1417 = vmatprep.mubr.bf16.mxu0 %v382
  %1418 = vmatmul.mubr.bf16.gmra.mxu0 %v381
  %v1419 = vpop.f32.mrf.mxu0
  %v1420 = vadd.f32 %v194, %v1419
  %v1421 = vpop.f32.mrf.mxu0
  %v1422 = vadd.f32 %v198, %v1421
  %v1423 = vpop.f32.mrf.mxu0
  %v1424 = vadd.f32 %v194, %v1423
  %v1425 = vpop.f32.mrf.mxu0
  %v1426 = vadd.f32 %v198, %v1425
  %1427 = vmatprep.mubr.bf16.mxu0 %v385
  %1428 = vmatmul.mubr.bf16.gmra.mxu0 %v384
  %v1429 = vpop.f32.mrf.mxu0
  %v1430 = vadd.f32 %v194, %v1429
  %v1431 = vpop.f32.mrf.mxu0
  %v1432 = vadd.f32 %v198, %v1431
  %v1433 = vpop.f32.mrf.mxu0
  %v1434 = vadd.f32 %v194, %v1433
  %v1435 = vpop.f32.mrf.mxu0
  %v1436 = vadd.f32 %v198, %v1435
  %1437 = vmatprep.mubr.bf16.mxu0 %v388
  %1438 = vmatmul.mubr.bf16.gmra.mxu0 %v387
  %v1439 = vpop.f32.mrf.mxu0
  %v1440 = vadd.f32 %v194, %v1439
  %v1441 = vpop.f32.mrf.mxu0
  %v1442 = vadd.f32 %v198, %v1441
  %v1443 = vpop.f32.mrf.mxu0
  %v1444 = vadd.f32 %v194, %v1443
  %v1445 = vpop.f32.mrf.mxu0
  %v1446 = vadd.f32 %v198, %v1445
  %1447 = vmatprep.mubr.bf16.mxu0 %v391
  %1448 = vmatmul.mubr.bf16.gmra.mxu0 %v390
  %v1449 = vpop.f32.mrf.mxu0
  %v1450 = vadd.f32 %v194, %v1449
  %v1451 = vpop.f32.mrf.mxu0
  %v1452 = vadd.f32 %v198, %v1451
  %v1453 = vpop.f32.mrf.mxu0
  %v1454 = vadd.f32 %v194, %v1453
  %v1455 = vpop.f32.mrf.mxu0
  %v1456 = vadd.f32 %v198, %v1455
  %1457 = vmatprep.mubr.bf16.mxu0 %v394
  %1458 = vmatmul.mubr.bf16.gmra.mxu0 %v393
  %v1459 = vpop.f32.mrf.mxu0
  %v1460 = vadd.f32 %v194, %v1459
  %v1461 = vpop.f32.mrf.mxu0
  %v1462 = vadd.f32 %v198, %v1461
  %v1463 = vpop.f32.mrf.mxu0
  %v1464 = vadd.f32 %v194, %v1463
  %v1465 = vpop.f32.mrf.mxu0
  %v1466 = vadd.f32 %v198, %v1465
  %1467 = vmatprep.mubr.bf16.mxu0 %v397
  %1468 = vmatmul.mubr.bf16.gmra.mxu0 %v396
  %v1469 = vpop.f32.mrf.mxu0
  %v1470 = vadd.f32 %v194, %v1469
  %v1471 = vpop.f32.mrf.mxu0
  %v1472 = vadd.f32 %v198, %v1471
  %v1473 = vpop.f32.mrf.mxu0
  %v1474 = vadd.f32 %v194, %v1473
  %v1475 = vpop.f32.mrf.mxu0
  %v1476 = vadd.f32 %v198, %v1475
  %1477 = vmatprep.mubr.bf16.mxu0 %v400
  %1478 = vmatmul.mubr.bf16.gmra.mxu0 %v399
  %v1479 = vpop.f32.mrf.mxu0
  %v1480 = vadd.f32 %v194, %v1479
  %v1481 = vpop.f32.mrf.mxu0
  %v1482 = vadd.f32 %v198, %v1481
  %v1483 = vpop.f32.mrf.mxu0
  %v1484 = vadd.f32 %v194, %v1483
  %v1485 = vpop.f32.mrf.mxu0
  %v1486 = vadd.f32 %v198, %v1485
  %1487 = vmatprep.mubr.bf16.mxu0 %v403
  %1488 = vmatmul.mubr.bf16.gmra.mxu0 %v402
  %v1489 = vpop.f32.mrf.mxu0
  %v1490 = vadd.f32 %v194, %v1489
  %v1491 = vpop.f32.mrf.mxu0
  %v1492 = vadd.f32 %v198, %v1491
  %v1493 = vpop.f32.mrf.mxu0
  %v1494 = vadd.f32 %v194, %v1493
  %v1495 = vpop.f32.mrf.mxu0
  %v1496 = vadd.f32 %v198, %v1495
  %1497 = vmatprep.mubr.bf16.mxu0 %v406
  %1498 = vmatmul.mubr.bf16.gmra.mxu0 %v405
  %v1499 = vpop.f32.mrf.mxu0
  %v1500 = vadd.f32 %v194, %v1499
  %v1501 = vpop.f32.mrf.mxu0
  %v1502 = vadd.f32 %v198, %v1501
  %v1503 = vpop.f32.mrf.mxu0
  %v1504 = vadd.f32 %v194, %v1503
  %v1505 = vpop.f32.mrf.mxu0
  %v1506 = vadd.f32 %v198, %v1505
  %1507 = vmatprep.mubr.bf16.mxu0 %v409
  %1508 = vmatmul.mubr.bf16.gmra.mxu0 %v408
  %v1509 = vpop.f32.mrf.mxu0
  %v1510 = vadd.f32 %v194, %v1509
  %v1511 = vpop.f32.mrf.mxu0
  %v1512 = vadd.f32 %v198, %v1511
  %v1513 = vpop.f32.mrf.mxu0
  %v1514 = vadd.f32 %v194, %v1513
  %v1515 = vpop.f32.mrf.mxu0
  %v1516 = vadd.f32 %v198, %v1515
  %1517 = vdwg.mxu0
  %1518 = vmatprep.subr.bf16.mxu0 %v842
  %1519 = vmatpush1.bf16.msra.mxu0 %v841
  %1520 = vmatprep.subr.bf16.mxu0 %v838
  %1521 = vmatpush1.bf16.msra.mxu0 %v837
  %1522 = vmatprep.subr.bf16.mxu0 %v834
  %1523 = vmatpush1.bf16.msra.mxu0 %v833
  %1524 = vmatprep.subr.bf16.mxu0 %v830
  %1525 = vmatpush1.bf16.msra.mxu0 %v829
  %1526 = vmatprep.subr.bf16.mxu0 %v826
  %1527 = vmatpush1.bf16.msra.mxu0 %v825
  %1528 = vmatprep.subr.bf16.mxu0 %v822
  %1529 = vmatpush1.bf16.msra.mxu0 %v821
  %1530 = vmatprep.subr.bf16.mxu0 %v818
  %1531 = vmatpush1.bf16.msra.mxu0 %v817
  %1532 = vmatprep.subr.bf16.mxu0 %v814
  %1533 = vmatpush1.bf16.msra.mxu0 %v813
  %1534 = vmatprep.subr.bf16.mxu0 0
  %1535 = vmatpush2.bf16.msra.mxu0 0
  %1536 = vmatprep.subr.bf16.mxu0 0
  %1537 = vmatpush2.bf16.msra.mxu0 0
  %1538 = vmatprep.subr.bf16.mxu0 0
  %1539 = vmatpush2.bf16.msra.mxu0 0
  %1540 = vmatprep.subr.bf16.mxu0 0
  %1541 = vmatpush2.bf16.msra.mxu0 0
  %1542 = vmatprep.subr.bf16.mxu0 0
  %1543 = vmatpush2.bf16.msra.mxu0 0
  %1544 = vmatprep.subr.bf16.mxu0 0
  %1545 = vmatpush2.bf16.msra.mxu0 0
  %1546 = vmatprep.subr.bf16.mxu0 0
  %1547 = vmatpush2.bf16.msra.mxu0 0
  %1548 = vmatprep.subr.bf16.mxu0 0
  %1549 = vmatpush2.bf16.msra.mxu0 0
  %1550 = vmatprep.mubr.bf16.mxu0 0
  %1551 = vmatmul.mubr.bf16.gmra.mxu0 %v365
  %v1552 = vpop.f32.mrf.mxu0
  %v1553 = vadd.f32 %v1360, %v1552
  %v1554 = vpop.f32.mrf.mxu0
  %v1555 = vadd.f32 %v1362, %v1554
  %v1556 = vpop.f32.mrf.mxu0
  %v1557 = vadd.f32 %v1364, %v1556
  %v1558 = vpop.f32.mrf.mxu0
  %v1559 = vadd.f32 %v1366, %v1558
  %1560 = vmatprep.mubr.bf16.mxu0 0
  %1561 = vmatmul.mubr.bf16.gmra.mxu0 %v368
  %v1562 = vpop.f32.mrf.mxu0
  %v1563 = vadd.f32 %v1370, %v1562
  %v1564 = vpop.f32.mrf.mxu0
  %v1565 = vadd.f32 %v1372, %v1564
  %v1566 = vpop.f32.mrf.mxu0
  %v1567 = vadd.f32 %v1374, %v1566
  %v1568 = vpop.f32.mrf.mxu0
  %v1569 = vadd.f32 %v1376, %v1568
  %1570 = vmatprep.mubr.bf16.mxu0 0
  %1571 = vmatmul.mubr.bf16.gmra.mxu0 %v371
  %v1572 = vpop.f32.mrf.mxu0
  %v1573 = vadd.f32 %v1380, %v1572
  %v1574 = vpop.f32.mrf.mxu0
  %v1575 = vadd.f32 %v1382, %v1574
  %v1576 = vpop.f32.mrf.mxu0
  %v1577 = vadd.f32 %v1384, %v1576
  %v1578 = vpop.f32.mrf.mxu0
  %v1579 = vadd.f32 %v1386, %v1578
  %1580 = vmatprep.mubr.bf16.mxu0 0
  %1581 = vmatmul.mubr.bf16.gmra.mxu0 %v374
  %v1582 = vpop.f32.mrf.mxu0
  %v1583 = vadd.f32 %v1390, %v1582
  %v1584 = vpop.f32.mrf.mxu0
  %v1585 = vadd.f32 %v1392, %v1584
  %v1586 = vpop.f32.mrf.mxu0
  %v1587 = vadd.f32 %v1394, %v1586
  %v1588 = vpop.f32.mrf.mxu0
  %v1589 = vadd.f32 %v1396, %v1588
  %1590 = vmatprep.mubr.bf16.mxu0 0
  %1591 = vmatmul.mubr.bf16.gmra.mxu0 %v377
  %v1592 = vpop.f32.mrf.mxu0
  %v1593 = vadd.f32 %v1400, %v1592
  %v1594 = vpop.f32.mrf.mxu0
  %v1595 = vadd.f32 %v1402, %v1594
  %v1596 = vpop.f32.mrf.mxu0
  %v1597 = vadd.f32 %v1404, %v1596
  %v1598 = vpop.f32.mrf.mxu0
  %v1599 = vadd.f32 %v1406, %v1598
  %1600 = vmatprep.mubr.bf16.mxu0 0
  %1601 = vmatmul.mubr.bf16.gmra.mxu0 %v380
  %v1602 = vpop.f32.mrf.mxu0
  %v1603 = vadd.f32 %v1410, %v1602
  %v1604 = vpop.f32.mrf.mxu0
  %v1605 = vadd.f32 %v1412, %v1604
  %v1606 = vpop.f32.mrf.mxu0
  %v1607 = vadd.f32 %v1414, %v1606
  %v1608 = vpop.f32.mrf.mxu0
  %v1609 = vadd.f32 %v1416, %v1608
  %1610 = vmatprep.mubr.bf16.mxu0 0
  %1611 = vmatmul.mubr.bf16.gmra.mxu0 %v383
  %v1612 = vpop.f32.mrf.mxu0
  %v1613 = vadd.f32 %v1420, %v1612
  %v1614 = vpop.f32.mrf.mxu0
  %v1615 = vadd.f32 %v1422, %v1614
  %v1616 = vpop.f32.mrf.mxu0
  %v1617 = vadd.f32 %v1424, %v1616
  %v1618 = vpop.f32.mrf.mxu0
  %v1619 = vadd.f32 %v1426, %v1618
  %1620 = vmatprep.mubr.bf16.mxu0 0
  %1621 = vmatmul.mubr.bf16.gmra.mxu0 %v386
  %v1622 = vpop.f32.mrf.mxu0
  %v1623 = vadd.f32 %v1430, %v1622
  %v1624 = vpop.f32.mrf.mxu0
  %v1625 = vadd.f32 %v1432, %v1624
  %v1626 = vpop.f32.mrf.mxu0
  %v1627 = vadd.f32 %v1434, %v1626
  %v1628 = vpop.f32.mrf.mxu0
  %v1629 = vadd.f32 %v1436, %v1628
  %1630 = vmatprep.mubr.bf16.mxu0 0
  %1631 = vmatmul.mubr.bf16.gmra.mxu0 %v389
  %v1632 = vpop.f32.mrf.mxu0
  %v1633 = vadd.f32 %v1440, %v1632
  %v1634 = vpop.f32.mrf.mxu0
  %v1635 = vadd.f32 %v1442, %v1634
  %v1636 = vpop.f32.mrf.mxu0
  %v1637 = vadd.f32 %v1444, %v1636
  %v1638 = vpop.f32.mrf.mxu0
  %v1639 = vadd.f32 %v1446, %v1638
  %1640 = vmatprep.mubr.bf16.mxu0 0
  %1641 = vmatmul.mubr.bf16.gmra.mxu0 %v392
  %v1642 = vpop.f32.mrf.mxu0
  %v1643 = vadd.f32 %v1450, %v1642
  %v1644 = vpop.f32.mrf.mxu0
  %v1645 = vadd.f32 %v1452, %v1644
  %v1646 = vpop.f32.mrf.mxu0
  %v1647 = vadd.f32 %v1454, %v1646
  %v1648 = vpop.f32.mrf.mxu0
  %v1649 = vadd.f32 %v1456, %v1648
  %1650 = vmatprep.mubr.bf16.mxu0 0
  %1651 = vmatmul.mubr.bf16.gmra.mxu0 %v395
  %v1652 = vpop.f32.mrf.mxu0
  %v1653 = vadd.f32 %v1460, %v1652
  %v1654 = vpop.f32.mrf.mxu0
  %v1655 = vadd.f32 %v1462, %v1654
  %v1656 = vpop.f32.mrf.mxu0
  %v1657 = vadd.f32 %v1464, %v1656
  %v1658 = vpop.f32.mrf.mxu0
  %v1659 = vadd.f32 %v1466, %v1658
  %1660 = vmatprep.mubr.bf16.mxu0 0
  %1661 = vmatmul.mubr.bf16.gmra.mxu0 %v398
  %v1662 = vpop.f32.mrf.mxu0
  %v1663 = vadd.f32 %v1470, %v1662
  %v1664 = vpop.f32.mrf.mxu0
  %v1665 = vadd.f32 %v1472, %v1664
  %v1666 = vpop.f32.mrf.mxu0
  %v1667 = vadd.f32 %v1474, %v1666
  %v1668 = vpop.f32.mrf.mxu0
  %v1669 = vadd.f32 %v1476, %v1668
  %1670 = vmatprep.mubr.bf16.mxu0 0
  %1671 = vmatmul.mubr.bf16.gmra.mxu0 %v401
  %v1672 = vpop.f32.mrf.mxu0
  %v1673 = vadd.f32 %v1480, %v1672
  %v1674 = vpop.f32.mrf.mxu0
  %v1675 = vadd.f32 %v1482, %v1674
  %v1676 = vpop.f32.mrf.mxu0
  %v1677 = vadd.f32 %v1484, %v1676
  %v1678 = vpop.f32.mrf.mxu0
  %v1679 = vadd.f32 %v1486, %v1678
  %1680 = vmatprep.mubr.bf16.mxu0 0
  %1681 = vmatmul.mubr.bf16.gmra.mxu0 %v404
  %v1682 = vpop.f32.mrf.mxu0
  %v1683 = vadd.f32 %v1490, %v1682
  %v1684 = vpop.f32.mrf.mxu0
  %v1685 = vadd.f32 %v1492, %v1684
  %v1686 = vpop.f32.mrf.mxu0
  %v1687 = vadd.f32 %v1494, %v1686
  %v1688 = vpop.f32.mrf.mxu0
  %v1689 = vadd.f32 %v1496, %v1688
  %1690 = vmatprep.mubr.bf16.mxu0 0
  %1691 = vmatmul.mubr.bf16.gmra.mxu0 %v407
  %v1692 = vpop.f32.mrf.mxu0
  %v1693 = vadd.f32 %v1500, %v1692
  %v1694 = vpop.f32.mrf.mxu0
  %v1695 = vadd.f32 %v1502, %v1694
  %v1696 = vpop.f32.mrf.mxu0
  %v1697 = vadd.f32 %v1504, %v1696
  %v1698 = vpop.f32.mrf.mxu0
  %v1699 = vadd.f32 %v1506, %v1698
  %1700 = vmatprep.mubr.bf16.mxu0 0
  %1701 = vmatmul.mubr.bf16.gmra.mxu0 %v410
  %v1702 = vpop.f32.mrf.mxu0
  %v1703 = vadd.f32 %v1510, %v1702
  %v1704 = vpop.f32.mrf.mxu0
  %v1705 = vadd.f32 %v1512, %v1704
  %v1706 = vpop.f32.mrf.mxu0
  %v1707 = vadd.f32 %v1514, %v1706
  %v1708 = vpop.f32.mrf.mxu0
  %v1709 = vadd.f32 %v1516, %v1708
  %1710 = vdwg.mxu0
  %v1711 = vmax.f32 %v1167, 0.0
  %v1712 = vmax.f32 %v1169, 0.0
  %v1713 = vmax.f32 %v1553, 0.0
  %v1714 = vmax.f32 %v1555, 0.0
  %v1715 = vmax.f32 %v1171, 0.0
  %v1716 = vmax.f32 %v1173, 0.0
  %v1717 = vmax.f32 %v1557, 0.0
  %v1718 = vmax.f32 %v1559, 0.0
  %v1719 = vmax.f32 %v1177, 0.0
  %v1720 = vmax.f32 %v1179, 0.0
  %v1721 = vmax.f32 %v1563, 0.0
  %v1722 = vmax.f32 %v1565, 0.0
  %v1723 = vmax.f32 %v1181, 0.0
  %v1724 = vmax.f32 %v1183, 0.0
  %v1725 = vmax.f32 %v1567, 0.0
  %v1726 = vmax.f32 %v1569, 0.0
  %v1727 = vmax.f32 %v1187, 0.0
  %v1728 = vmax.f32 %v1189, 0.0
  %v1729 = vmax.f32 %v1573, 0.0
  %v1730 = vmax.f32 %v1575, 0.0
  %v1731 = vmax.f32 %v1191, 0.0
  %v1732 = vmax.f32 %v1193, 0.0
  %v1733 = vmax.f32 %v1577, 0.0
  %v1734 = vmax.f32 %v1579, 0.0
  %v1735 = vmax.f32 %v1197, 0.0
  %v1736 = vmax.f32 %v1199, 0.0
  %v1737 = vmax.f32 %v1583, 0.0
  %v1738 = vmax.f32 %v1585, 0.0
  %v1739 = vmax.f32 %v1201, 0.0
  %v1740 = vmax.f32 %v1203, 0.0
  %v1741 = vmax.f32 %v1587, 0.0
  %v1742 = vmax.f32 %v1589, 0.0
  %v1743 = vmax.f32 %v1207, 0.0
  %v1744 = vmax.f32 %v1209, 0.0
  %v1745 = vmax.f32 %v1593, 0.0
  %v1746 = vmax.f32 %v1595, 0.0
  %v1747 = vmax.f32 %v1211, 0.0
  %v1748 = vmax.f32 %v1213, 0.0
  %v1749 = vmax.f32 %v1597, 0.0
  %v1750 = vmax.f32 %v1599, 0.0
  %v1751 = vmax.f32 %v1217, 0.0
  %v1752 = vmax.f32 %v1219, 0.0
  %v1753 = vmax.f32 %v1603, 0.0
  %v1754 = vmax.f32 %v1605, 0.0
  %v1755 = vmax.f32 %v1221, 0.0
  %v1756 = vmax.f32 %v1223, 0.0
  %v1757 = vmax.f32 %v1607, 0.0
  %v1758 = vmax.f32 %v1609, 0.0
  %v1759 = vmax.f32 %v1227, 0.0
  %v1760 = vmax.f32 %v1229, 0.0
  %v1761 = vmax.f32 %v1613, 0.0
  %v1762 = vmax.f32 %v1615, 0.0
  %v1763 = vmax.f32 %v1231, 0.0
  %v1764 = vmax.f32 %v1233, 0.0
  %v1765 = vmax.f32 %v1617, 0.0
  %v1766 = vmax.f32 %v1619, 0.0
  %v1767 = vmax.f32 %v1237, 0.0
  %v1768 = vmax.f32 %v1239, 0.0
  %v1769 = vmax.f32 %v1623, 0.0
  %v1770 = vmax.f32 %v1625, 0.0
  %v1771 = vmax.f32 %v1241, 0.0
  %v1772 = vmax.f32 %v1243, 0.0
  %v1773 = vmax.f32 %v1627, 0.0
  %v1774 = vmax.f32 %v1629, 0.0
  %v1775 = vmax.f32 %v1247, 0.0
  %v1776 = vmax.f32 %v1249, 0.0
  %v1777 = vmax.f32 %v1633, 0.0
  %v1778 = vmax.f32 %v1635, 0.0
  %v1779 = vmax.f32 %v1251, 0.0
  %v1780 = vmax.f32 %v1253, 0.0
  %v1781 = vmax.f32 %v1637, 0.0
  %v1782 = vmax.f32 %v1639, 0.0
  %v1783 = vmax.f32 %v1257, 0.0
  %v1784 = vmax.f32 %v1259, 0.0
  %v1785 = vmax.f32 %v1643, 0.0
  %v1786 = vmax.f32 %v1645, 0.0
  %v1787 = vmax.f32 %v1261, 0.0
  %v1788 = vmax.f32 %v1263, 0.0
  %v1789 = vmax.f32 %v1647, 0.0
  %v1790 = vmax.f32 %v1649, 0.0
  %v1791 = vmax.f32 %v1267, 0.0
  %v1792 = vmax.f32 %v1269, 0.0
  %v1793 = vmax.f32 %v1653, 0.0
  %v1794 = vmax.f32 %v1655, 0.0
  %v1795 = vmax.f32 %v1271, 0.0
  %v1796 = vmax.f32 %v1273, 0.0
  %v1797 = vmax.f32 %v1657, 0.0
  %v1798 = vmax.f32 %v1659, 0.0
  %v1799 = vmax.f32 %v1277, 0.0
  %v1800 = vmax.f32 %v1279, 0.0
  %v1801 = vmax.f32 %v1663, 0.0
  %v1802 = vmax.f32 %v1665, 0.0
  %v1803 = vmax.f32 %v1281, 0.0
  %v1804 = vmax.f32 %v1283, 0.0
  %v1805 = vmax.f32 %v1667, 0.0
  %v1806 = vmax.f32 %v1669, 0.0
  %v1807 = vmax.f32 %v1287, 0.0
  %v1808 = vmax.f32 %v1289, 0.0
  %v1809 = vmax.f32 %v1673, 0.0
  %v1810 = vmax.f32 %v1675, 0.0
  %v1811 = vmax.f32 %v1291, 0.0
  %v1812 = vmax.f32 %v1293, 0.0
  %v1813 = vmax.f32 %v1677, 0.0
  %v1814 = vmax.f32 %v1679, 0.0
  %v1815 = vmax.f32 %v1297, 0.0
  %v1816 = vmax.f32 %v1299, 0.0
  %v1817 = vmax.f32 %v1683, 0.0
  %v1818 = vmax.f32 %v1685, 0.0
  %v1819 = vmax.f32 %v1301, 0.0
  %v1820 = vmax.f32 %v1303, 0.0
  %v1821 = vmax.f32 %v1687, 0.0
  %v1822 = vmax.f32 %v1689, 0.0
  %v1823 = vmax.f32 %v1307, 0.0
  %v1824 = vmax.f32 %v1309, 0.0
  %v1825 = vmax.f32 %v1693, 0.0
  %v1826 = vmax.f32 %v1695, 0.0
  %v1827 = vmax.f32 %v1311, 0.0
  %v1828 = vmax.f32 %v1313, 0.0
  %v1829 = vmax.f32 %v1697, 0.0
  %v1830 = vmax.f32 %v1699, 0.0
  %v1831 = vmax.f32 %v1317, 0.0
  %v1832 = vmax.f32 %v1319, 0.0
  %v1833 = vmax.f32 %v1703, 0.0
  %v1834 = vmax.f32 %v1705, 0.0
  %v1835 = vmax.f32 %v1321, 0.0
  %v1836 = vmax.f32 %v1323, 0.0
  %v1837 = vmax.f32 %v1707, 0.0
  %v1838 = vmax.f32 %v1709, 0.0
  %v1839 = vmax.f32 %v1711, %v1719
  %v1840 = vmax.f32 %v1839, %v1727
  %v1841 = vmax.f32 %v1840, %v1735
  %v1842 = vmax.f32 %v1841, %v1743
  %v1843 = vmax.f32 %v1842, %v1751
  %v1844 = vmax.f32 %v1843, %v1759
  %v1845 = vmax.f32 %v1844, %v1767
  %v1846 = vmax.f32 %v1845, %v1775
  %v1847 = vmax.f32 %v1846, %v1783
  %v1848 = vmax.f32 %v1847, %v1791
  %v1849 = vmax.f32 %v1848, %v1799
  %v1850 = vmax.f32 %v1849, %v1807
  %v1851 = vmax.f32 %v1850, %v1815
  %v1852 = vmax.f32 %v1851, %v1823
  %v1853 = vmax.f32 %v1852, %v1831
  %v1854 = vmax.f32 %v1712, %v1720
  %v1855 = vmax.f32 %v1854, %v1728
  %v1856 = vmax.f32 %v1855, %v1736
  %v1857 = vmax.f32 %v1856, %v1744
  %v1858 = vmax.f32 %v1857, %v1752
  %v1859 = vmax.f32 %v1858, %v1760
  %v1860 = vmax.f32 %v1859, %v1768
  %v1861 = vmax.f32 %v1860, %v1776
  %v1862 = vmax.f32 %v1861, %v1784
  %v1863 = vmax.f32 %v1862, %v1792
  %v1864 = vmax.f32 %v1863, %v1800
  %v1865 = vmax.f32 %v1864, %v1808
  %v1866 = vmax.f32 %v1865, %v1816
  %v1867 = vmax.f32 %v1866, %v1824
  %v1868 = vmax.f32 %v1867, %v1832
  %v1869 = vmax.f32 %v1713, %v1721
  %v1870 = vmax.f32 %v1869, %v1729
  %v1871 = vmax.f32 %v1870, %v1737
  %v1872 = vmax.f32 %v1871, %v1745
  %v1873 = vmax.f32 %v1872, %v1753
  %v1874 = vmax.f32 %v1873, %v1761
  %v1875 = vmax.f32 %v1874, %v1769
  %v1876 = vmax.f32 %v1875, %v1777
  %v1877 = vmax.f32 %v1876, %v1785
  %v1878 = vmax.f32 %v1877, %v1793
  %v1879 = vmax.f32 %v1878, %v1801
  %v1880 = vmax.f32 %v1879, %v1809
  %v1881 = vmax.f32 %v1880, %v1817
  %v1882 = vmax.f32 %v1881, %v1825
  %v1883 = vmax.f32 %v1882, %v1833
  %v1884 = vmax.f32 %v1714, %v1722
  %v1885 = vmax.f32 %v1884, %v1730
  %v1886 = vmax.f32 %v1885, %v1738
  %v1887 = vmax.f32 %v1886, %v1746
  %v1888 = vmax.f32 %v1887, %v1754
  %v1889 = vmax.f32 %v1888, %v1762
  %v1890 = vmax.f32 %v1889, %v1770
  %v1891 = vmax.f32 %v1890, %v1778
  %v1892 = vmax.f32 %v1891, %v1786
  %v1893 = vmax.f32 %v1892, %v1794
  %v1894 = vmax.f32 %v1893, %v1802
  %v1895 = vmax.f32 %v1894, %v1810
  %v1896 = vmax.f32 %v1895, %v1818
  %v1897 = vmax.f32 %v1896, %v1826
  %v1898 = vmax.f32 %v1897, %v1834
  %v1899 = vmax.f32 %v1715, %v1723
  %v1900 = vmax.f32 %v1899, %v1731
  %v1901 = vmax.f32 %v1900, %v1739
  %v1902 = vmax.f32 %v1901, %v1747
  %v1903 = vmax.f32 %v1902, %v1755
  %v1904 = vmax.f32 %v1903, %v1763
  %v1905 = vmax.f32 %v1904, %v1771
  %v1906 = vmax.f32 %v1905, %v1779
  %v1907 = vmax.f32 %v1906, %v1787
  %v1908 = vmax.f32 %v1907, %v1795
  %v1909 = vmax.f32 %v1908, %v1803
  %v1910 = vmax.f32 %v1909, %v1811
  %v1911 = vmax.f32 %v1910, %v1819
  %v1912 = vmax.f32 %v1911, %v1827
  %v1913 = vmax.f32 %v1912, %v1835
  %v1914 = vmax.f32 %v1716, %v1724
  %v1915 = vmax.f32 %v1914, %v1732
  %v1916 = vmax.f32 %v1915, %v1740
  %v1917 = vmax.f32 %v1916, %v1748
  %v1918 = vmax.f32 %v1917, %v1756
  %v1919 = vmax.f32 %v1918, %v1764
  %v1920 = vmax.f32 %v1919, %v1772
  %v1921 = vmax.f32 %v1920, %v1780
  %v1922 = vmax.f32 %v1921, %v1788
  %v1923 = vmax.f32 %v1922, %v1796
  %v1924 = vmax.f32 %v1923, %v1804
  %v1925 = vmax.f32 %v1924, %v1812
  %v1926 = vmax.f32 %v1925, %v1820
  %v1927 = vmax.f32 %v1926, %v1828
  %v1928 = vmax.f32 %v1927, %v1836
  %v1929 = vmax.f32 %v1717, %v1725
  %v1930 = vmax.f32 %v1929, %v1733
  %v1931 = vmax.f32 %v1930, %v1741
  %v1932 = vmax.f32 %v1931, %v1749
  %v1933 = vmax.f32 %v1932, %v1757
  %v1934 = vmax.f32 %v1933, %v1765
  %v1935 = vmax.f32 %v1934, %v1773
  %v1936 = vmax.f32 %v1935, %v1781
  %v1937 = vmax.f32 %v1936, %v1789
  %v1938 = vmax.f32 %v1937, %v1797
  %v1939 = vmax.f32 %v1938, %v1805
  %v1940 = vmax.f32 %v1939, %v1813
  %v1941 = vmax.f32 %v1940, %v1821
  %v1942 = vmax.f32 %v1941, %v1829
  %v1943 = vmax.f32 %v1942, %v1837
  %v1944 = vmax.f32 %v1718, %v1726
  %v1945 = vmax.f32 %v1944, %v1734
  %v1946 = vmax.f32 %v1945, %v1742
  %v1947 = vmax.f32 %v1946, %v1750
  %v1948 = vmax.f32 %v1947, %v1758
  %v1949 = vmax.f32 %v1948, %v1766
  %v1950 = vmax.f32 %v1949, %v1774
  %v1951 = vmax.f32 %v1950, %v1782
  %v1952 = vmax.f32 %v1951, %v1790
  %v1953 = vmax.f32 %v1952, %v1798
  %v1954 = vmax.f32 %v1953, %v1806
  %v1955 = vmax.f32 %v1954, %v1814
  %v1956 = vmax.f32 %v1955, %v1822
  %v1957 = vmax.f32 %v1956, %v1830
  %v1958 = vmax.f32 %v1957, %v1838
  %v1959 = vpack.c.bf16 %v1913, %v1853
  %v1960 = vpack.c.bf16 %v1928, %v1868
  %v1961 = vpack.c.bf16 %v1943, %v1883
  %v1962 = vpack.c.bf16 %v1958, %v1898
  %v1963 = vld [vmem:[%s3] sm:$0xff]
  %v1964 = vld [vmem:[%s3 + $0x8] sm:$0xff]
  %v1965 = vld [vmem:[%s3 + $0x10] sm:$0xff]
  %v1966 = vld [vmem:[%s3 + $0x18] sm:$0xff]
  %v1967 = vld [vmem:[%s3 + $0x20] sm:$0xff]
  %v1968 = vld [vmem:[%s3 + $0x28] sm:$0xff]
  %v1969 = vld [vmem:[%s3 + $0x30] sm:$0xff]
  %v1970 = vld [vmem:[%s3 + $0x38] sm:$0xff]
  %v1971 = vld [vmem:[%s3 + $0x40] sm:$0xff]
  %v1972 = vld [vmem:[%s3 + $0x48] sm:$0xff]
  %v1973 = vld [vmem:[%s3 + $0x50] sm:$0xff]
  %v1974 = vld [vmem:[%s3 + $0x58] sm:$0xff]
  %v1975 = vld [vmem:[%s3 + $0x60] sm:$0xff]
  %v1976 = vld [vmem:[%s3 + $0x68] sm:$0xff]
  %v1977 = vld [vmem:[%s3 + $0x70] sm:$0xff]
  %v1978 = vld [vmem:[%s3 + $0x78] sm:$0xff]
  %v1979 = vld [vmem:[%s3 + $0x80] sm:$0xff]
  %v1980 = vld [vmem:[%s3 + $0x88] sm:$0xff]
  %v1981 = vld [vmem:[%s3 + $0x90] sm:$0xff]
  %v1982 = vld [vmem:[%s3 + $0x98] sm:$0xff]
  %v1983 = vld [vmem:[%s3 + $0xa0] sm:$0xff]
  %v1984 = vld [vmem:[%s3 + $0xa8] sm:$0xff]
  %v1985 = vld [vmem:[%s3 + $0xb0] sm:$0xff]
  %v1986 = vld [vmem:[%s3 + $0xb8] sm:$0xff]
  %v1987 = vld [vmem:[%s3 + $0xc0] sm:$0xff]
  %v1988 = vld [vmem:[%s3 + $0xc8] sm:$0xff]
  %v1989 = vld [vmem:[%s3 + $0xd0] sm:$0xff]
  %v1990 = vld [vmem:[%s3 + $0xd8] sm:$0xff]
  %v1991 = vld [vmem:[%s3 + $0xe0] sm:$0xff]
  %v1992 = vld [vmem:[%s3 + $0xe8] sm:$0xff]
  %v1993 = vld [vmem:[%s3 + $0xf0] sm:$0xff]
  %v1994 = vld [vmem:[%s3 + $0xf8] sm:$0xff]
  %v1995 = vld [vmem:[%s3 + $0x100] sm:$0xff]
  %v1996 = vld [vmem:[%s3 + $0x108] sm:$0xff]
  %v1997 = vld [vmem:[%s3 + $0x110] sm:$0xff]
  %v1998 = vld [vmem:[%s3 + $0x118] sm:$0xff]
  %v1999 = vld [vmem:[%s3 + $0x120] sm:$0xff]
  %v2000 = vld [vmem:[%s3 + $0x128] sm:$0xff]
  %v2001 = vld [vmem:[%s3 + $0x130] sm:$0xff]
  %v2002 = vld [vmem:[%s3 + $0x138] sm:$0xff]
  %v2003 = vld [vmem:[%s3 + $0x140] sm:$0xff]
  %v2004 = vld [vmem:[%s3 + $0x148] sm:$0xff]
  %v2005 = vld [vmem:[%s3 + $0x150] sm:$0xff]
  %v2006 = vld [vmem:[%s3 + $0x158] sm:$0xff]
  %v2007 = vld [vmem:[%s3 + $0x160] sm:$0xff]
  %v2008 = vld [vmem:[%s3 + $0x168] sm:$0xff]
  %v2009 = vld [vmem:[%s3 + $0x170] sm:$0xff]
  %v2010 = vld [vmem:[%s3 + $0x178] sm:$0xff]
  %v2011 = vld [vmem:[%s3 + $0x180] sm:$0xff]
  %v2012 = vld [vmem:[%s3 + $0x188] sm:$0xff]
  %v2013 = vld [vmem:[%s3 + $0x190] sm:$0xff]
  %v2014 = vld [vmem:[%s3 + $0x198] sm:$0xff]
  %v2015 = vld [vmem:[%s3 + $0x1a0] sm:$0xff]
  %v2016 = vld [vmem:[%s3 + $0x1a8] sm:$0xff]
  %v2017 = vld [vmem:[%s3 + $0x1b0] sm:$0xff]
  %v2018 = vld [vmem:[%s3 + $0x1b8] sm:$0xff]
  %v2019 = vld [vmem:[%s3 + $0x1c0] sm:$0xff]
  %v2020 = vld [vmem:[%s3 + $0x1c8] sm:$0xff]
  %v2021 = vld [vmem:[%s3 + $0x1d0] sm:$0xff]
  %v2022 = vld [vmem:[%s3 + $0x1d8] sm:$0xff]
  %v2023 = vld [vmem:[%s3 + $0x1e0] sm:$0xff]
  %v2024 = vld [vmem:[%s3 + $0x1e8] sm:$0xff]
  %v2025 = vld [vmem:[%s3 + $0x1f0] sm:$0xff]
  %v2026 = vld [vmem:[%s3 + $0x1f8] sm:$0xff]
  %v2027 = vld [vmem:[%s4] sm:$0x3]
  %v2029 = vlaneseq
  %v2030 = vshrl.u32 %v2029, 7
  %v2031 = vsub.s32 0, %v2030
  %v2032 = vrot.slane %v2027, %v2031
  %v2033 = vlaneseq
  %v2034 = vshrl.u32 %v2033, 7
  %v2035 = vsub.s32 1, %v2034
  %v2036 = vrot.slane %v2027, %v2035
  %v2103 = vunpack.c.l.b16 %v1963
  %v2104 = vunpack.c.h.b16 %v1963
  %v2105 = vunpack.c.l.b16 %v1964
  %v2106 = vunpack.c.h.b16 %v1964
  %v2107 = vunpack.c.l.b16 %v1965
  %v2108 = vunpack.c.h.b16 %v1965
  %v2109 = vunpack.c.l.b16 %v1966
  %v2110 = vunpack.c.h.b16 %v1966
  %v2111 = vunpack.c.l.b16 %v1967
  %v2112 = vunpack.c.h.b16 %v1967
  %v2113 = vunpack.c.l.b16 %v1968
  %v2114 = vunpack.c.h.b16 %v1968
  %v2115 = vunpack.c.l.b16 %v1969
  %v2116 = vunpack.c.h.b16 %v1969
  %v2117 = vunpack.c.l.b16 %v1970
  %v2118 = vunpack.c.h.b16 %v1970
  %v2119 = vunpack.c.l.b16 %v1971
  %v2120 = vunpack.c.h.b16 %v1971
  %v2121 = vunpack.c.l.b16 %v1972
  %v2122 = vunpack.c.h.b16 %v1972
  %v2123 = vunpack.c.l.b16 %v1973
  %v2124 = vunpack.c.h.b16 %v1973
  %v2125 = vunpack.c.l.b16 %v1974
  %v2126 = vunpack.c.h.b16 %v1974
  %v2127 = vunpack.c.l.b16 %v1975
  %v2128 = vunpack.c.h.b16 %v1975
  %v2129 = vunpack.c.l.b16 %v1976
  %v2130 = vunpack.c.h.b16 %v1976
  %v2131 = vunpack.c.l.b16 %v1977
  %v2132 = vunpack.c.h.b16 %v1977
  %v2133 = vunpack.c.l.b16 %v1978
  %v2134 = vunpack.c.h.b16 %v1978
  %v2135 = vunpack.c.l.b16 %v1979
  %v2136 = vunpack.c.h.b16 %v1979
  %v2137 = vunpack.c.l.b16 %v1980
  %v2138 = vunpack.c.h.b16 %v1980
  %v2139 = vunpack.c.l.b16 %v1981
  %v2140 = vunpack.c.h.b16 %v1981
  %v2141 = vunpack.c.l.b16 %v1982
  %v2142 = vunpack.c.h.b16 %v1982
  %v2143 = vunpack.c.l.b16 %v1983
  %v2144 = vunpack.c.h.b16 %v1983
  %v2145 = vunpack.c.l.b16 %v1984
  %v2146 = vunpack.c.h.b16 %v1984
  %v2147 = vunpack.c.l.b16 %v1985
  %v2148 = vunpack.c.h.b16 %v1985
  %v2149 = vunpack.c.l.b16 %v1986
  %v2150 = vunpack.c.h.b16 %v1986
  %v2151 = vunpack.c.l.b16 %v1987
  %v2152 = vunpack.c.h.b16 %v1987
  %v2153 = vunpack.c.l.b16 %v1988
  %v2154 = vunpack.c.h.b16 %v1988
  %v2155 = vunpack.c.l.b16 %v1989
  %v2156 = vunpack.c.h.b16 %v1989
  %v2157 = vunpack.c.l.b16 %v1990
  %v2158 = vunpack.c.h.b16 %v1990
  %v2159 = vunpack.c.l.b16 %v1991
  %v2160 = vunpack.c.h.b16 %v1991
  %v2161 = vunpack.c.l.b16 %v1992
  %v2162 = vunpack.c.h.b16 %v1992
  %v2163 = vunpack.c.l.b16 %v1993
  %v2164 = vunpack.c.h.b16 %v1993
  %v2165 = vunpack.c.l.b16 %v1994
  %v2166 = vunpack.c.h.b16 %v1994
  %v2167 = vunpack.c.l.b16 %v1995
  %v2168 = vunpack.c.h.b16 %v1995
  %v2169 = vunpack.c.l.b16 %v1996
  %v2170 = vunpack.c.h.b16 %v1996
  %v2171 = vunpack.c.l.b16 %v1997
  %v2172 = vunpack.c.h.b16 %v1997
  %v2173 = vunpack.c.l.b16 %v1998
  %v2174 = vunpack.c.h.b16 %v1998
  %v2175 = vunpack.c.l.b16 %v1999
  %v2176 = vunpack.c.h.b16 %v1999
  %v2177 = vunpack.c.l.b16 %v2000
  %v2178 = vunpack.c.h.b16 %v2000
  %v2179 = vunpack.c.l.b16 %v2001
  %v2180 = vunpack.c.h.b16 %v2001
  %v2181 = vunpack.c.l.b16 %v2002
  %v2182 = vunpack.c.h.b16 %v2002
  %v2183 = vunpack.c.l.b16 %v2003
  %v2184 = vunpack.c.h.b16 %v2003
  %v2185 = vunpack.c.l.b16 %v2004
  %v2186 = vunpack.c.h.b16 %v2004
  %v2187 = vunpack.c.l.b16 %v2005
  %v2188 = vunpack.c.h.b16 %v2005
  %v2189 = vunpack.c.l.b16 %v2006
  %v2190 = vunpack.c.h.b16 %v2006
  %v2191 = vunpack.c.l.b16 %v2007
  %v2192 = vunpack.c.h.b16 %v2007
  %v2193 = vunpack.c.l.b16 %v2008
  %v2194 = vunpack.c.h.b16 %v2008
  %v2195 = vunpack.c.l.b16 %v2009
  %v2196 = vunpack.c.h.b16 %v2009
  %v2197 = vunpack.c.l.b16 %v2010
  %v2198 = vunpack.c.h.b16 %v2010
  %v2199 = vunpack.c.l.b16 %v2011
  %v2200 = vunpack.c.h.b16 %v2011
  %v2201 = vunpack.c.l.b16 %v2012
  %v2202 = vunpack.c.h.b16 %v2012
  %v2203 = vunpack.c.l.b16 %v2013
  %v2204 = vunpack.c.h.b16 %v2013
  %v2205 = vunpack.c.l.b16 %v2014
  %v2206 = vunpack.c.h.b16 %v2014
  %v2207 = vunpack.c.l.b16 %v2015
  %v2208 = vunpack.c.h.b16 %v2015
  %v2209 = vunpack.c.l.b16 %v2016
  %v2210 = vunpack.c.h.b16 %v2016
  %v2211 = vunpack.c.l.b16 %v2017
  %v2212 = vunpack.c.h.b16 %v2017
  %v2213 = vunpack.c.l.b16 %v2018
  %v2214 = vunpack.c.h.b16 %v2018
  %v2215 = vunpack.c.l.b16 %v2019
  %v2216 = vunpack.c.h.b16 %v2019
  %v2217 = vunpack.c.l.b16 %v2020
  %v2218 = vunpack.c.h.b16 %v2020
  %v2219 = vunpack.c.l.b16 %v2021
  %v2220 = vunpack.c.h.b16 %v2021
  %v2221 = vunpack.c.l.b16 %v2022
  %v2222 = vunpack.c.h.b16 %v2022
  %v2223 = vunpack.c.l.b16 %v2023
  %v2224 = vunpack.c.h.b16 %v2023
  %v2225 = vunpack.c.l.b16 %v2024
  %v2226 = vunpack.c.h.b16 %v2024
  %v2227 = vunpack.c.l.b16 %v2025
  %v2228 = vunpack.c.h.b16 %v2025
  %v2229 = vunpack.c.l.b16 %v2026
  %v2230 = vunpack.c.h.b16 %v2026
  %v2231 = vpack.c.b16 %v2105, %v2103
  %v2232 = vpack.c.b16 %v2106, %v2104
  %v2233 = vpack.c.b16 %v2109, %v2107
  %v2234 = vpack.c.b16 %v2110, %v2108
  %v2235 = vpack.c.b16 %v2113, %v2111
  %v2236 = vpack.c.b16 %v2114, %v2112
  %v2237 = vpack.c.b16 %v2117, %v2115
  %v2238 = vpack.c.b16 %v2118, %v2116
  %v2239 = vpack.c.b16 %v2121, %v2119
  %v2240 = vpack.c.b16 %v2122, %v2120
  %v2241 = vpack.c.b16 %v2125, %v2123
  %v2242 = vpack.c.b16 %v2126, %v2124
  %v2243 = vpack.c.b16 %v2129, %v2127
  %v2244 = vpack.c.b16 %v2130, %v2128
  %v2245 = vpack.c.b16 %v2133, %v2131
  %v2246 = vpack.c.b16 %v2134, %v2132
  %v2247 = vpack.c.b16 %v2137, %v2135
  %v2248 = vpack.c.b16 %v2138, %v2136
  %v2249 = vpack.c.b16 %v2141, %v2139
  %v2250 = vpack.c.b16 %v2142, %v2140
  %v2251 = vpack.c.b16 %v2145, %v2143
  %v2252 = vpack.c.b16 %v2146, %v2144
  %v2253 = vpack.c.b16 %v2149, %v2147
  %v2254 = vpack.c.b16 %v2150, %v2148
  %v2255 = vpack.c.b16 %v2153, %v2151
  %v2256 = vpack.c.b16 %v2154, %v2152
  %v2257 = vpack.c.b16 %v2157, %v2155
  %v2258 = vpack.c.b16 %v2158, %v2156
  %v2259 = vpack.c.b16 %v2161, %v2159
  %v2260 = vpack.c.b16 %v2162, %v2160
  %v2261 = vpack.c.b16 %v2165, %v2163
  %v2262 = vpack.c.b16 %v2166, %v2164
  %v2263 = vpack.c.b16 %v2169, %v2167
  %v2264 = vpack.c.b16 %v2170, %v2168
  %v2265 = vpack.c.b16 %v2173, %v2171
  %v2266 = vpack.c.b16 %v2174, %v2172
  %v2267 = vpack.c.b16 %v2177, %v2175
  %v2268 = vpack.c.b16 %v2178, %v2176
  %v2269 = vpack.c.b16 %v2181, %v2179
  %v2270 = vpack.c.b16 %v2182, %v2180
  %v2271 = vpack.c.b16 %v2185, %v2183
  %v2272 = vpack.c.b16 %v2186, %v2184
  %v2273 = vpack.c.b16 %v2189, %v2187
  %v2274 = vpack.c.b16 %v2190, %v2188
  %v2275 = vpack.c.b16 %v2193, %v2191
  %v2276 = vpack.c.b16 %v2194, %v2192
  %v2277 = vpack.c.b16 %v2197, %v2195
  %v2278 = vpack.c.b16 %v2198, %v2196
  %v2279 = vpack.c.b16 %v2201, %v2199
  %v2280 = vpack.c.b16 %v2202, %v2200
  %v2281 = vpack.c.b16 %v2205, %v2203
  %v2282 = vpack.c.b16 %v2206, %v2204
  %v2283 = vpack.c.b16 %v2209, %v2207
  %v2284 = vpack.c.b16 %v2210, %v2208
  %v2285 = vpack.c.b16 %v2213, %v2211
  %v2286 = vpack.c.b16 %v2214, %v2212
  %v2287 = vpack.c.b16 %v2217, %v2215
  %v2288 = vpack.c.b16 %v2218, %v2216
  %v2289 = vpack.c.b16 %v2221, %v2219
  %v2290 = vpack.c.b16 %v2222, %v2220
  %v2291 = vpack.c.b16 %v2225, %v2223
  %v2292 = vpack.c.b16 %v2226, %v2224
  %v2293 = vpack.c.b16 %v2229, %v2227
  %v2294 = vpack.c.b16 %v2230, %v2228
  %2359 = vmatprep.subr.bf16.mxu0 %v2246
  %2360 = vmatpush1.bf16.msra.mxu0 %v2245
  %2361 = vmatprep.subr.bf16.mxu0 %v2244
  %2362 = vmatpush1.bf16.msra.mxu0 %v2243
  %2363 = vmatprep.subr.bf16.mxu0 %v2242
  %2364 = vmatpush1.bf16.msra.mxu0 %v2241
  %2365 = vmatprep.subr.bf16.mxu0 %v2240
  %2366 = vmatpush1.bf16.msra.mxu0 %v2239
  %2367 = vmatprep.subr.bf16.mxu0 %v2238
  %2368 = vmatpush1.bf16.msra.mxu0 %v2237
  %2369 = vmatprep.subr.bf16.mxu0 %v2236
  %2370 = vmatpush1.bf16.msra.mxu0 %v2235
  %2371 = vmatprep.subr.bf16.mxu0 %v2234
  %2372 = vmatpush1.bf16.msra.mxu0 %v2233
  %2373 = vmatprep.subr.bf16.mxu0 %v2232
  %2374 = vmatpush1.bf16.msra.mxu0 %v2231
  %2375 = vmatprep.subr.bf16.mxu0 %v2262
  %2376 = vmatpush2.bf16.msra.mxu0 %v2261
  %2377 = vmatprep.subr.bf16.mxu0 %v2260
  %2378 = vmatpush2.bf16.msra.mxu0 %v2259
  %2379 = vmatprep.subr.bf16.mxu0 %v2258
  %2380 = vmatpush2.bf16.msra.mxu0 %v2257
  %2381 = vmatprep.subr.bf16.mxu0 %v2256
  %2382 = vmatpush2.bf16.msra.mxu0 %v2255
  %2383 = vmatprep.subr.bf16.mxu0 %v2254
  %2384 = vmatpush2.bf16.msra.mxu0 %v2253
  %2385 = vmatprep.subr.bf16.mxu0 %v2252
  %2386 = vmatpush2.bf16.msra.mxu0 %v2251
  %2387 = vmatprep.subr.bf16.mxu0 %v2250
  %2388 = vmatpush2.bf16.msra.mxu0 %v2249
  %2389 = vmatprep.subr.bf16.mxu0 %v2248
  %2390 = vmatpush2.bf16.msra.mxu0 %v2247
  %2391 = vmatprep.mubr.bf16.mxu0 %v1960
  %2392 = vmatmul.mubr.bf16.gmra.mxu0 %v1959
  %v2393 = vpop.f32.mrf.mxu0
  %v2394 = vadd.f32 %v2032, %v2393
  %v2395 = vpop.f32.mrf.mxu0
  %v2396 = vadd.f32 %v2036, %v2395
  %v2397 = vpop.f32.mrf.mxu0
  %v2398 = vadd.f32 %v2032, %v2397
  %v2399 = vpop.f32.mrf.mxu0
  %v2400 = vadd.f32 %v2036, %v2399
  %2401 = vdwg.mxu0
  %2402 = vmatprep.subr.bf16.mxu0 %v2278
  %2403 = vmatpush1.bf16.msra.mxu0 %v2277
  %2404 = vmatprep.subr.bf16.mxu0 %v2276
  %2405 = vmatpush1.bf16.msra.mxu0 %v2275
  %2406 = vmatprep.subr.bf16.mxu0 %v2274
  %2407 = vmatpush1.bf16.msra.mxu0 %v2273
  %2408 = vmatprep.subr.bf16.mxu0 %v2272
  %2409 = vmatpush1.bf16.msra.mxu0 %v2271
  %2410 = vmatprep.subr.bf16.mxu0 %v2270
  %2411 = vmatpush1.bf16.msra.mxu0 %v2269
  %2412 = vmatprep.subr.bf16.mxu0 %v2268
  %2413 = vmatpush1.bf16.msra.mxu0 %v2267
  %2414 = vmatprep.subr.bf16.mxu0 %v2266
  %2415 = vmatpush1.bf16.msra.mxu0 %v2265
  %2416 = vmatprep.subr.bf16.mxu0 %v2264
  %2417 = vmatpush1.bf16.msra.mxu0 %v2263
  %2418 = vmatprep.subr.bf16.mxu0 %v2294
  %2419 = vmatpush2.bf16.msra.mxu0 %v2293
  %2420 = vmatprep.subr.bf16.mxu0 %v2292
  %2421 = vmatpush2.bf16.msra.mxu0 %v2291
  %2422 = vmatprep.subr.bf16.mxu0 %v2290
  %2423 = vmatpush2.bf16.msra.mxu0 %v2289
  %2424 = vmatprep.subr.bf16.mxu0 %v2288
  %2425 = vmatpush2.bf16.msra.mxu0 %v2287
  %2426 = vmatprep.subr.bf16.mxu0 %v2286
  %2427 = vmatpush2.bf16.msra.mxu0 %v2285
  %2428 = vmatprep.subr.bf16.mxu0 %v2284
  %2429 = vmatpush2.bf16.msra.mxu0 %v2283
  %2430 = vmatprep.subr.bf16.mxu0 %v2282
  %2431 = vmatpush2.bf16.msra.mxu0 %v2281
  %2432 = vmatprep.subr.bf16.mxu0 %v2280
  %2433 = vmatpush2.bf16.msra.mxu0 %v2279
  %2434 = vmatprep.mubr.bf16.mxu0 %v1962
  %2435 = vmatmul.mubr.bf16.gmra.mxu0 %v1961
  %v2436 = vpop.f32.mrf.mxu0
  %v2437 = vadd.f32 %v2394, %v2436
  %v2438 = vpop.f32.mrf.mxu0
  %v2439 = vadd.f32 %v2396, %v2438
  %v2440 = vpop.f32.mrf.mxu0
  %v2441 = vadd.f32 %v2398, %v2440
  %v2442 = vpop.f32.mrf.mxu0
  %v2443 = vadd.f32 %v2400, %v2442
  %2444 = vdwg.mxu0
  %2445 = vst [vmem:[%s5] sm:$0xff] %v2437
  %2446 = vst [vmem:[%s5 + $0x8] sm:$0xff] %v2439
  %2447 = vst [vmem:[%s5 + $0x10] sm:$0xff] %v2441
  %2448 = vst [vmem:[%s5 + $0x18] sm:$0xff] %v2443
  // Predicated region
  $region22: #{sentence_embedding_forward.1} parent=0 // pred_check
    _
  $region23: #{sentence_embedding_forward.1} parent=0 // pred_check_branch
    %2450 = sbr.rel (0) target = $region25
  $region24: #{sentence_embedding_forward.1} parent=0 // pred_region
    _
  $region25: #{sentence_embedding_forward.1} parent=0 // pred_fallthru
    _
  // Predicated region
  $region26: #{sentence_embedding_forward.1} parent=0 // pred_check
    _
  $region27: #{sentence_embedding_forward.1} parent=0 // pred_check_branch
    %2452 = sbr.rel (0) target = $region29
  $region28: #{sentence_embedding_forward.1} parent=0 // pred_region
    _
  $region29: #{sentence_embedding_forward.1} parent=0 // pred_fallthru
    _

</llo_original>
